<compile_context>
chip_gen: v7x
topology: tpu7x:2x2x1
jax: 0.10.0
libtpu: 0.0.40
codegen_flags: <defaults>
</compile_context>

<pallas_src>
import functools

import jax
import jax.numpy as jnp
from jax import lax
from jax.experimental import pallas as pl
from jax.experimental.pallas import tpu as pltpu


# ----------------------------------------------------------------------------
# Kernel: one grid step processes `block_b` batch elements.
# ----------------------------------------------------------------------------
def _attentionhead_kernel(q_ref, k_ref, v_ref, m_ref,
                          wq_ref, bq_ref, wk_ref, bk_ref, wv_ref, bv_ref,
                          wo_ref, bo_ref,
                          out_ref, w_ref, *, nr_heads, emb_channels, scale):
    N, E = nr_heads, emb_channels
    Bt, Tq, Cq = q_ref.shape
    Tk, Ck = k_ref.shape[1], k_ref.shape[2]
    Cv = v_ref.shape[2]

    # Merge (Bt, T) -> rows so the projections fill the MXU M dimension.
    # Matmul operands in bf16 (native MXU), accumulation in f32.
    x_q = q_ref[...].reshape(Bt * Tq, Cq).astype(jnp.bfloat16)
    x_k = k_ref[...].reshape(Bt * Tk, Ck).astype(jnp.bfloat16)
    x_v = v_ref[...].reshape(Bt * Tk, Cv).astype(jnp.bfloat16)

    neg_m = (-10000.0) * m_ref[...]                       # [Bt, Tq, Tk]  f32

    # Running output-projection accumulator; output bias added once at the end.
    acc = jnp.zeros((Bt * Tq, Cq), jnp.float32)

    # Contraction patterns: contract last dims directly -> no per-head .T
    # (keeps the XLU free for the softmax reductions).
    dn_qk = (((2,), (2,)), ((0,), (0,)))   # [Bt,Tq,E] x [Bt,Tk,E] -> [Bt,Tq,Tk]
    dn_pv = (((2,), (1,)), ((0,), (0,)))   # [Bt,Tq,Tk] x [Bt,Tk,E] -> [Bt,Tq,E]

    # N is a small static constant -> static loop; each head's temporaries are
    # stored / accumulated immediately (no lists, no concatenates).
    for h in range(N):
        # Per-head projections (weights pre-split per head in the wrapper, so
        # no sub-128-lane slicing of a fused projection result).
        # scale folded into q post-bias: (scale*(xW+b)) @ k^T == scale*(q@k^T).
        qh = (jnp.dot(x_q, wq_ref[h], preferred_element_type=jnp.float32)
              + bq_ref[h]) * scale                        # [Bt*Tq, E]  f32
        kh = (jnp.dot(x_k, wk_ref[h], preferred_element_type=jnp.float32)
              + bk_ref[h])                                # [Bt*Tk, E]  f32
        vh = (jnp.dot(x_v, wv_ref[h], preferred_element_type=jnp.float32)
              + bv_ref[h])                                # [Bt*Tk, E]  f32

        qh = qh.reshape(Bt, Tq, E).astype(jnp.bfloat16)
        kh = kh.reshape(Bt, Tk, E).astype(jnp.bfloat16)
        vh = vh.reshape(Bt, Tk, E).astype(jnp.bfloat16)

        s = lax.dot_general(qh, kh, dimension_numbers=dn_qk,
                            preferred_element_type=jnp.float32) + neg_m
        # numerically-stabilized softmax (f32), EUP reciprocal for the denom
        s = s - jnp.max(s, axis=-1, keepdims=True)
        e = jnp.exp(s)
        p = e * pl.reciprocal(jnp.sum(e, axis=-1, keepdims=True), approx=True)

        # Attention weights written straight out in the final layout; `p` dies
        # right after this head's work (no N-wide live state).
        w_ref[:, h] = p.astype(w_ref.dtype)               # [Bt, Tq, Tk]

        oh = lax.dot_general(p.astype(jnp.bfloat16), vh, dimension_numbers=dn_pv,
                             preferred_element_type=jnp.float32)   # [Bt,Tq,E]
        acc = acc + jnp.dot(oh.reshape(Bt * Tq, E).astype(jnp.bfloat16),
                            wo_ref[h], preferred_element_type=jnp.float32)

    out_ref[...] = (acc + bo_ref[...]).reshape(Bt, Tq, Cq).astype(out_ref.dtype)


# ----------------------------------------------------------------------------
def _pick_block_b(batch, t_q):
    """Largest divisor of `batch` keeping ~<=256 rows per projection matmul,
    but preferring >= 2 grid steps when possible (v7x has 2 TensorCores)."""
    target_rows = 256
    best = 1
    for d in range(1, batch + 1):
        if batch % d == 0 and d * t_q <= max(target_rows, t_q):
            best = d
    if batch // best < 2:
        for d in range(best - 1, 0, -1):
            if batch % d == 0 and batch // d >= 2:
                best = d
                break
    return best


def attentionhead_forward(params, query, key, value, mask, emb_channels, nr_heads):
    B, Tq, Cq = query.shape
    Tk, Ck = key.shape[1], key.shape[2]
    Cv = value.shape[2]
    N, E = nr_heads, emb_channels
    scale = float(E) ** (-0.5)

    # Pre-split weights per head and cast matmul operands to bf16 (halves the
    # resident weight VMEM / DMA bytes); biases stay f32 (added post-accum).
    wq = params["to_query"][0].reshape(Cq, N, E).transpose(1, 0, 2).astype(jnp.bfloat16)
    wk = params["to_key"][0].reshape(Ck, N, E).transpose(1, 0, 2).astype(jnp.bfloat16)
    wv = params["to_value"][0].reshape(Cv, N, E).transpose(1, 0, 2).astype(jnp.bfloat16)
    wo = params["to_out"][0].reshape(N, E, Cq).astype(jnp.bfloat16)
    bq = params["to_query"][1].reshape(N, 1, E)
    bk = params["to_key"][1].reshape(N, 1, E)
    bv = params["to_value"][1].reshape(N, 1, E)
    bo = params["to_out"][1].reshape(1, Cq)

    block_b = _pick_block_b(B, Tq)
    grid = (B // block_b,)

    kernel = functools.partial(
        _attentionhead_kernel, nr_heads=N, emb_channels=E, scale=scale)

    const3 = lambda b: (0, 0, 0)

    att_out, att_weight = pl.pallas_call(
        kernel,
        out_shape=(
            jax.ShapeDtypeStruct((B, Tq, Cq), jnp.float32),
            jax.ShapeDtypeStruct((B, N, Tq, Tk), jnp.float32),
        ),
        grid_spec=pltpu.PrefetchScalarGridSpec(
            num_scalar_prefetch=0,
            grid=grid,
            in_specs=[
                pl.BlockSpec((block_b, Tq, Cq), lambda b: (b, 0, 0)),
                pl.BlockSpec((block_b, Tk, Ck), lambda b: (b, 0, 0)),
                pl.BlockSpec((block_b, Tk, Cv), lambda b: (b, 0, 0)),
                pl.BlockSpec((block_b, Tq, Tk), lambda b: (b, 0, 0)),
                # per-head weights / biases: constant index -> resident
                pl.BlockSpec((N, Cq, E), const3),
                pl.BlockSpec((N, 1, E), const3),
                pl.BlockSpec((N, Ck, E), const3),
                pl.BlockSpec((N, 1, E), const3),
                pl.BlockSpec((N, Cv, E), const3),
                pl.BlockSpec((N, 1, E), const3),
                pl.BlockSpec((N, E, Cq), const3),
                pl.BlockSpec((1, Cq), lambda b: (0, 0)),
            ],
            out_specs=[
                pl.BlockSpec((block_b, Tq, Cq), lambda b: (b, 0, 0)),
                pl.BlockSpec((block_b, N, Tq, Tk), lambda b: (b, 0, 0, 0)),
            ],
        ),
        compiler_params=pltpu.CompilerParams(
            dimension_semantics=("parallel",)),
    )(query, key, value, mask, wq, bq, wk, bk, wv, bv, wo, bo)

    return att_out, att_weight


# ----------------------------------------------------------------------------
def init_params(key, in_channels, emb_channels, nr_heads):
    qc = kc = vc = in_channels
    hid = nr_heads * emb_channels
    ks = jax.random.split(key, 8)

    def lin(kw, kb, cin, cout):
        # PyTorch stores W as [cout, cin]; we keep [cin, cout] for x @ W
        w = jax.random.normal(kw, (cin, cout), jnp.float32) * 0.02
        b = jax.random.normal(kb, (cout,), jnp.float32) * 0.02
        return w, b

    return {
        "to_query": lin(ks[0], ks[1], qc, hid),
        "to_key":   lin(ks[2], ks[3], kc, hid),
        "to_value": lin(ks[4], ks[5], vc, hid),
        "to_out":   lin(ks[6], ks[7], hid, qc),
    }


# ----------------------------------------------------------------------------
if __name__ == "__main__":
    B, T, C = 2, 8, 32
    emb_channels, nr_heads = 16, 4

    root = jax.random.PRNGKey(0)
    kp, kq, kk, kv, km = jax.random.split(root, 5)

    params = init_params(kp, C, emb_channels, nr_heads)
    query = jax.random.normal(kq, (B, T, C), jnp.float32)
    key = jax.random.normal(kk, (B, T, C), jnp.float32)
    value = jax.random.normal(kv, (B, T, C), jnp.float32)
    # binary mask (1 = masked out via -10000), like the PyTorch module expects
    mask = (jax.random.uniform(km, (B, T, T)) > 0.8).astype(jnp.float32)

    att_out, att_weight = attentionhead_forward(
        params, query, key, value, mask, emb_channels, nr_heads)
    jax.block_until_ready((att_out, att_weight))

    # plain-JAX f32 reference
    def ref_forward():
        def lin(x, w, b):
            return x @ w + b
        q = lin(query, *params["to_query"]).reshape(B, T, nr_heads, emb_channels)
        k = lin(key, *params["to_key"]).reshape(B, T, nr_heads, emb_channels)
        v = lin(value, *params["to_value"]).reshape(B, T, nr_heads, emb_channels)
        q, k, v = (jnp.transpose(a, (0, 2, 1, 3)) for a in (q, k, v))
        s = jnp.einsum("bnqe,bnke->bnqk", q, k) * (emb_channels ** -0.5)
        s = s - 10000.0 * mask[:, None]
        w = jax.nn.softmax(s, axis=-1)
        o = jnp.einsum("bnqk,bnke->bnqe", w, v)
        o = jnp.transpose(o, (0, 2, 1, 3)).reshape(B, T, nr_heads * emb_channels)
        o = lin(o, *params["to_out"])
        return o, w

    ref_out, ref_w = ref_forward()
    assert att_out.shape == (B, T, C)
    assert att_weight.shape == (B, nr_heads, T, T)
    # bf16 MXU operands + EUP approx reciprocal -> relaxed tolerance vs f32 ref
    assert jnp.allclose(att_out, ref_out, atol=2e-2, rtol=2e-2)
    assert jnp.allclose(att_weight, ref_w, atol=2e-2, rtol=2e-2)
    print("KERNEL_OK")
</pallas_src>

<mosaic_0001>
module attributes {stable_mosaic.version = 11 : i64} {
  func.func @_attentionhead_kernel(%arg0: i32, %arg1: memref<1x8x32xf32, #tpu.memory_space<vmem>>, %arg2: memref<1x8x32xf32, #tpu.memory_space<vmem>>, %arg3: memref<1x8x32xf32, #tpu.memory_space<vmem>>, %arg4: memref<1x8x8xf32, #tpu.memory_space<vmem>>, %arg5: memref<4x32x16xbf16, #tpu.memory_space<vmem>>, %arg6: memref<4x1x16xf32, #tpu.memory_space<vmem>>, %arg7: memref<4x32x16xbf16, #tpu.memory_space<vmem>>, %arg8: memref<4x1x16xf32, #tpu.memory_space<vmem>>, %arg9: memref<4x32x16xbf16, #tpu.memory_space<vmem>>, %arg10: memref<4x1x16xf32, #tpu.memory_space<vmem>>, %arg11: memref<4x16x32xbf16, #tpu.memory_space<vmem>>, %arg12: memref<1x32xf32, #tpu.memory_space<vmem>>, %arg13: memref<1x8x32xf32, #tpu.memory_space<vmem>>, %arg14: memref<1x4x8x8xf32, #tpu.memory_space<vmem>>) attributes {dimension_semantics = [#tpu.dimension_semantics<parallel>], iteration_bounds = array<i64: 2>, scalar_prefetch = 0 : i64, scratch_operands = 0 : i64, tpu.core_type = #tpu.core_type<tc>, window_params = [{transform_indices = @transform_0, window_bounds = array<i64: 1, 8, 32>}, {transform_indices = @transform_1, window_bounds = array<i64: 1, 8, 32>}, {transform_indices = @transform_2, window_bounds = array<i64: 1, 8, 32>}, {transform_indices = @transform_3, window_bounds = array<i64: 1, 8, 8>}, {pipeline_mode = #tpu.pipeline_mode<synchronous>, transform_indices = @transform_4, window_bounds = array<i64: 4, 32, 16>}, {pipeline_mode = #tpu.pipeline_mode<synchronous>, transform_indices = @transform_5, window_bounds = array<i64: 4, 1, 16>}, {pipeline_mode = #tpu.pipeline_mode<synchronous>, transform_indices = @transform_6, window_bounds = array<i64: 4, 32, 16>}, {pipeline_mode = #tpu.pipeline_mode<synchronous>, transform_indices = @transform_7, window_bounds = array<i64: 4, 1, 16>}, {pipeline_mode = #tpu.pipeline_mode<synchronous>, transform_indices = @transform_8, window_bounds = array<i64: 4, 32, 16>}, {pipeline_mode = #tpu.pipeline_mode<synchronous>, transform_indices = @transform_9, window_bounds = array<i64: 4, 1, 16>}, {pipeline_mode = #tpu.pipeline_mode<synchronous>, transform_indices = @transform_10, window_bounds = array<i64: 4, 16, 32>}, {pipeline_mode = #tpu.pipeline_mode<synchronous>, transform_indices = @transform_11, window_bounds = array<i64: 1, 32>}, {transform_indices = @transform_12, window_bounds = array<i64: 1, 8, 32>}, {transform_indices = @transform_13, window_bounds = array<i64: 1, 4, 8, 8>}]} {
    %c0 = arith.constant 0 : index
    %c0_0 = arith.constant 0 : index
    %c0_1 = arith.constant 0 : index
    %0 = vector.load %arg1[%c0, %c0_0, %c0_1] : memref<1x8x32xf32, #tpu.memory_space<vmem>>, vector<1x8x32xf32>
    %1 = vector.shape_cast %0 : vector<1x8x32xf32> to vector<8x32xf32>
    %2 = arith.truncf %1 : vector<8x32xf32> to vector<8x32xbf16>
    %c0_2 = arith.constant 0 : index
    %c0_3 = arith.constant 0 : index
    %c0_4 = arith.constant 0 : index
    %3 = vector.load %arg2[%c0_2, %c0_3, %c0_4] : memref<1x8x32xf32, #tpu.memory_space<vmem>>, vector<1x8x32xf32>
    %4 = vector.shape_cast %3 : vector<1x8x32xf32> to vector<8x32xf32>
    %5 = arith.truncf %4 : vector<8x32xf32> to vector<8x32xbf16>
    %c0_5 = arith.constant 0 : index
    %c0_6 = arith.constant 0 : index
    %c0_7 = arith.constant 0 : index
    %6 = vector.load %arg3[%c0_5, %c0_6, %c0_7] : memref<1x8x32xf32, #tpu.memory_space<vmem>>, vector<1x8x32xf32>
    %7 = vector.shape_cast %6 : vector<1x8x32xf32> to vector<8x32xf32>
    %8 = arith.truncf %7 : vector<8x32xf32> to vector<8x32xbf16>
    %c0_8 = arith.constant 0 : index
    %c0_9 = arith.constant 0 : index
    %c0_10 = arith.constant 0 : index
    %9 = vector.load %arg4[%c0_8, %c0_9, %c0_10] : memref<1x8x8xf32, #tpu.memory_space<vmem>>, vector<1x8x8xf32>
    %cst = arith.constant -1.000000e+04 : f32
    %10 = vector.broadcast %cst : f32 to vector<1x8x8xf32>
    %11 = arith.mulf %10, %9 : vector<1x8x8xf32>
    %cst_11 = arith.constant 0.000000e+00 : f32
    %12 = vector.broadcast %cst_11 : f32 to vector<8x32xf32>
    %c0_12 = arith.constant 0 : index
    %c0_13 = arith.constant 0 : index
    %c0_14 = arith.constant 0 : index
    %13 = vector.load %arg5[%c0_12, %c0_13, %c0_14] : memref<4x32x16xbf16, #tpu.memory_space<vmem>>, vector<1x32x16xbf16>
    %14 = vector.shape_cast %13 : vector<1x32x16xbf16> to vector<32x16xbf16>
    %cst_15 = arith.constant dense<0.000000e+00> : vector<8x16xf32>
    %15 = tpu.matmul %2, %14, %cst_15 {dimension_numbers = #tpu.dot_dimension_numbers<[1], [0], [0], [1], [0, 0, 1, 1], [], []>} : vector<8x32xbf16>, vector<32x16xbf16>, vector<8x16xf32> -> vector<8x16xf32>
    %c0_16 = arith.constant 0 : index
    %c0_17 = arith.constant 0 : index
    %c0_18 = arith.constant 0 : index
    %16 = vector.load %arg6[%c0_16, %c0_17, %c0_18] : memref<4x1x16xf32, #tpu.memory_space<vmem>>, vector<1x1x16xf32>
    %17 = vector.shape_cast %16 : vector<1x1x16xf32> to vector<1x16xf32>
    %18 = vector.broadcast %17 : vector<1x16xf32> to vector<8x16xf32>
    %19 = arith.addf %15, %18 : vector<8x16xf32>
    %cst_19 = arith.constant 2.500000e-01 : f32
    %20 = vector.broadcast %cst_19 : f32 to vector<8x16xf32>
    %21 = arith.mulf %19, %20 : vector<8x16xf32>
    %c0_20 = arith.constant 0 : index
    %c0_21 = arith.constant 0 : index
    %c0_22 = arith.constant 0 : index
    %22 = vector.load %arg7[%c0_20, %c0_21, %c0_22] : memref<4x32x16xbf16, #tpu.memory_space<vmem>>, vector<1x32x16xbf16>
    %23 = vector.shape_cast %22 : vector<1x32x16xbf16> to vector<32x16xbf16>
    %cst_23 = arith.constant dense<0.000000e+00> : vector<8x16xf32>
    %24 = tpu.matmul %5, %23, %cst_23 {dimension_numbers = #tpu.dot_dimension_numbers<[1], [0], [0], [1], [0, 0, 1, 1], [], []>} : vector<8x32xbf16>, vector<32x16xbf16>, vector<8x16xf32> -> vector<8x16xf32>
    %c0_24 = arith.constant 0 : index
    %c0_25 = arith.constant 0 : index
    %c0_26 = arith.constant 0 : index
    %25 = vector.load %arg8[%c0_24, %c0_25, %c0_26] : memref<4x1x16xf32, #tpu.memory_space<vmem>>, vector<1x1x16xf32>
    %26 = vector.shape_cast %25 : vector<1x1x16xf32> to vector<1x16xf32>
    %27 = vector.broadcast %26 : vector<1x16xf32> to vector<8x16xf32>
    %28 = arith.addf %24, %27 : vector<8x16xf32>
    %c0_27 = arith.constant 0 : index
    %c0_28 = arith.constant 0 : index
    %c0_29 = arith.constant 0 : index
    %29 = vector.load %arg9[%c0_27, %c0_28, %c0_29] : memref<4x32x16xbf16, #tpu.memory_space<vmem>>, vector<1x32x16xbf16>
    %30 = vector.shape_cast %29 : vector<1x32x16xbf16> to vector<32x16xbf16>
    %cst_30 = arith.constant dense<0.000000e+00> : vector<8x16xf32>
    %31 = tpu.matmul %8, %30, %cst_30 {dimension_numbers = #tpu.dot_dimension_numbers<[1], [0], [0], [1], [0, 0, 1, 1], [], []>} : vector<8x32xbf16>, vector<32x16xbf16>, vector<8x16xf32> -> vector<8x16xf32>
    %c0_31 = arith.constant 0 : index
    %c0_32 = arith.constant 0 : index
    %c0_33 = arith.constant 0 : index
    %32 = vector.load %arg10[%c0_31, %c0_32, %c0_33] : memref<4x1x16xf32, #tpu.memory_space<vmem>>, vector<1x1x16xf32>
    %33 = vector.shape_cast %32 : vector<1x1x16xf32> to vector<1x16xf32>
    %34 = vector.broadcast %33 : vector<1x16xf32> to vector<8x16xf32>
    %35 = arith.addf %31, %34 : vector<8x16xf32>
    %36 = vector.shape_cast %21 : vector<8x16xf32> to vector<1x8x16xf32>
    %37 = arith.truncf %36 : vector<1x8x16xf32> to vector<1x8x16xbf16>
    %38 = vector.shape_cast %28 : vector<8x16xf32> to vector<1x8x16xf32>
    %39 = arith.truncf %38 : vector<1x8x16xf32> to vector<1x8x16xbf16>
    %40 = vector.shape_cast %35 : vector<8x16xf32> to vector<1x8x16xf32>
    %41 = arith.truncf %40 : vector<1x8x16xf32> to vector<1x8x16xbf16>
    %cst_34 = arith.constant dense<0.000000e+00> : vector<1x8x8xf32>
    %42 = tpu.matmul %37, %39, %cst_34 {dimension_numbers = #tpu.dot_dimension_numbers<[2], [2], [1], [1], [0, 0, 0, 1, 1, 1], [0], [0]>} : vector<1x8x16xbf16>, vector<1x8x16xbf16>, vector<1x8x8xf32> -> vector<1x8x8xf32>
    %43 = arith.addf %42, %11 : vector<1x8x8xf32>
    %cst_35 = arith.constant dense<0xFF800000> : vector<1x8xf32>
    %44 = vector.multi_reduction <maximumf>, %43, %cst_35 [2] : vector<1x8x8xf32> to vector<1x8xf32>
    %45 = vector.shape_cast %44 : vector<1x8xf32> to vector<1x8x1xf32>
    %46 = vector.broadcast %45 : vector<1x8x1xf32> to vector<1x8x8xf32>
    %47 = arith.subf %43, %46 : vector<1x8x8xf32>
    %48 = math.exp %47 : vector<1x8x8xf32>
    %cst_36 = arith.constant dense<0.000000e+00> : vector<1x8xf32>
    %49 = vector.multi_reduction <add>, %48, %cst_36 [2] : vector<1x8x8xf32> to vector<1x8xf32>
    %50 = vector.shape_cast %49 : vector<1x8xf32> to vector<1x8x1xf32>
    %51 = tpu.reciprocal %50 {approx = true} : vector<1x8x1xf32> -> vector<1x8x1xf32>
    %52 = vector.broadcast %51 : vector<1x8x1xf32> to vector<1x8x8xf32>
    %53 = arith.mulf %48, %52 : vector<1x8x8xf32>
    %c0_37 = arith.constant 0 : index
    %c0_38 = arith.constant 0 : index
    %c0_39 = arith.constant 0 : index
    %c0_40 = arith.constant 0 : index
    %54 = vector.load %arg14[%c0_37, %c0_38, %c0_39, %c0_40] : memref<1x4x8x8xf32, #tpu.memory_space<vmem>>, vector<1x1x8x8xf32>
    %55 = vector.shape_cast %54 : vector<1x1x8x8xf32> to vector<1x8x8xf32>
    %56 = vector.shape_cast %53 : vector<1x8x8xf32> to vector<1x1x8x8xf32>
    tpu.vector_store %arg14[%c0_37, %c0_38, %c0_39, %c0_40], %56 {strides = array<i32>} : memref<1x4x8x8xf32, #tpu.memory_space<vmem>>, vector<1x1x8x8xf32>,
    %57 = arith.truncf %53 : vector<1x8x8xf32> to vector<1x8x8xbf16>
    %cst_41 = arith.constant dense<0.000000e+00> : vector<1x8x16xf32>
    %58 = tpu.matmul %57, %41, %cst_41 {dimension_numbers = #tpu.dot_dimension_numbers<[2], [1], [1], [2], [0, 0, 0, 1, 1, 2], [0], [0]>} : vector<1x8x8xbf16>, vector<1x8x16xbf16>, vector<1x8x16xf32> -> vector<1x8x16xf32>
    %59 = vector.shape_cast %58 : vector<1x8x16xf32> to vector<8x16xf32>
    %60 = arith.truncf %59 : vector<8x16xf32> to vector<8x16xbf16>
    %c0_42 = arith.constant 0 : index
    %c0_43 = arith.constant 0 : index
    %c0_44 = arith.constant 0 : index
    %61 = vector.load %arg11[%c0_42, %c0_43, %c0_44] : memref<4x16x32xbf16, #tpu.memory_space<vmem>>, vector<1x16x32xbf16>
    %62 = vector.shape_cast %61 : vector<1x16x32xbf16> to vector<16x32xbf16>
    %cst_45 = arith.constant dense<0.000000e+00> : vector<8x32xf32>
    %63 = tpu.matmul %60, %62, %cst_45 {dimension_numbers = #tpu.dot_dimension_numbers<[1], [0], [0], [1], [0, 0, 1, 1], [], []>} : vector<8x16xbf16>, vector<16x32xbf16>, vector<8x32xf32> -> vector<8x32xf32>
    %64 = arith.addf %12, %63 : vector<8x32xf32>
    %c1 = arith.constant 1 : index
    %c0_46 = arith.constant 0 : index
    %c0_47 = arith.constant 0 : index
    %65 = vector.load %arg5[%c1, %c0_46, %c0_47] : memref<4x32x16xbf16, #tpu.memory_space<vmem>>, vector<1x32x16xbf16>
    %66 = vector.shape_cast %65 : vector<1x32x16xbf16> to vector<32x16xbf16>
    %cst_48 = arith.constant dense<0.000000e+00> : vector<8x16xf32>
    %67 = tpu.matmul %2, %66, %cst_48 {dimension_numbers = #tpu.dot_dimension_numbers<[1], [0], [0], [1], [0, 0, 1, 1], [], []>} : vector<8x32xbf16>, vector<32x16xbf16>, vector<8x16xf32> -> vector<8x16xf32>
    %c1_49 = arith.constant 1 : index
    %c0_50 = arith.constant 0 : index
    %c0_51 = arith.constant 0 : index
    %68 = vector.load %arg6[%c1_49, %c0_50, %c0_51] : memref<4x1x16xf32, #tpu.memory_space<vmem>>, vector<1x1x16xf32>
    %69 = vector.shape_cast %68 : vector<1x1x16xf32> to vector<1x16xf32>
    %70 = vector.broadcast %69 : vector<1x16xf32> to vector<8x16xf32>
    %71 = arith.addf %67, %70 : vector<8x16xf32>
    %cst_52 = arith.constant 2.500000e-01 : f32
    %72 = vector.broadcast %cst_52 : f32 to vector<8x16xf32>
    %73 = arith.mulf %71, %72 : vector<8x16xf32>
    %c1_53 = arith.constant 1 : index
    %c0_54 = arith.constant 0 : index
    %c0_55 = arith.constant 0 : index
    %74 = vector.load %arg7[%c1_53, %c0_54, %c0_55] : memref<4x32x16xbf16, #tpu.memory_space<vmem>>, vector<1x32x16xbf16>
    %75 = vector.shape_cast %74 : vector<1x32x16xbf16> to vector<32x16xbf16>
    %cst_56 = arith.constant dense<0.000000e+00> : vector<8x16xf32>
    %76 = tpu.matmul %5, %75, %cst_56 {dimension_numbers = #tpu.dot_dimension_numbers<[1], [0], [0], [1], [0, 0, 1, 1], [], []>} : vector<8x32xbf16>, vector<32x16xbf16>, vector<8x16xf32> -> vector<8x16xf32>
    %c1_57 = arith.constant 1 : index
    %c0_58 = arith.constant 0 : index
    %c0_59 = arith.constant 0 : index
    %77 = vector.load %arg8[%c1_57, %c0_58, %c0_59] : memref<4x1x16xf32, #tpu.memory_space<vmem>>, vector<1x1x16xf32>
    %78 = vector.shape_cast %77 : vector<1x1x16xf32> to vector<1x16xf32>
    %79 = vector.broadcast %78 : vector<1x16xf32> to vector<8x16xf32>
    %80 = arith.addf %76, %79 : vector<8x16xf32>
    %c1_60 = arith.constant 1 : index
    %c0_61 = arith.constant 0 : index
    %c0_62 = arith.constant 0 : index
    %81 = vector.load %arg9[%c1_60, %c0_61, %c0_62] : memref<4x32x16xbf16, #tpu.memory_space<vmem>>, vector<1x32x16xbf16>
    %82 = vector.shape_cast %81 : vector<1x32x16xbf16> to vector<32x16xbf16>
    %cst_63 = arith.constant dense<0.000000e+00> : vector<8x16xf32>
    %83 = tpu.matmul %8, %82, %cst_63 {dimension_numbers = #tpu.dot_dimension_numbers<[1], [0], [0], [1], [0, 0, 1, 1], [], []>} : vector<8x32xbf16>, vector<32x16xbf16>, vector<8x16xf32> -> vector<8x16xf32>
    %c1_64 = arith.constant 1 : index
    %c0_65 = arith.constant 0 : index
    %c0_66 = arith.constant 0 : index
    %84 = vector.load %arg10[%c1_64, %c0_65, %c0_66] : memref<4x1x16xf32, #tpu.memory_space<vmem>>, vector<1x1x16xf32>
    %85 = vector.shape_cast %84 : vector<1x1x16xf32> to vector<1x16xf32>
    %86 = vector.broadcast %85 : vector<1x16xf32> to vector<8x16xf32>
    %87 = arith.addf %83, %86 : vector<8x16xf32>
    %88 = vector.shape_cast %73 : vector<8x16xf32> to vector<1x8x16xf32>
    %89 = arith.truncf %88 : vector<1x8x16xf32> to vector<1x8x16xbf16>
    %90 = vector.shape_cast %80 : vector<8x16xf32> to vector<1x8x16xf32>
    %91 = arith.truncf %90 : vector<1x8x16xf32> to vector<1x8x16xbf16>
    %92 = vector.shape_cast %87 : vector<8x16xf32> to vector<1x8x16xf32>
    %93 = arith.truncf %92 : vector<1x8x16xf32> to vector<1x8x16xbf16>
    %cst_67 = arith.constant dense<0.000000e+00> : vector<1x8x8xf32>
    %94 = tpu.matmul %89, %91, %cst_67 {dimension_numbers = #tpu.dot_dimension_numbers<[2], [2], [1], [1], [0, 0, 0, 1, 1, 1], [0], [0]>} : vector<1x8x16xbf16>, vector<1x8x16xbf16>, vector<1x8x8xf32> -> vector<1x8x8xf32>
    %95 = arith.addf %94, %11 : vector<1x8x8xf32>
    %cst_68 = arith.constant dense<0xFF800000> : vector<1x8xf32>
    %96 = vector.multi_reduction <maximumf>, %95, %cst_68 [2] : vector<1x8x8xf32> to vector<1x8xf32>
    %97 = vector.shape_cast %96 : vector<1x8xf32> to vector<1x8x1xf32>
    %98 = vector.broadcast %97 : vector<1x8x1xf32> to vector<1x8x8xf32>
    %99 = arith.subf %95, %98 : vector<1x8x8xf32>
    %100 = math.exp %99 : vector<1x8x8xf32>
    %cst_69 = arith.constant dense<0.000000e+00> : vector<1x8xf32>
    %101 = vector.multi_reduction <add>, %100, %cst_69 [2] : vector<1x8x8xf32> to vector<1x8xf32>
    %102 = vector.shape_cast %101 : vector<1x8xf32> to vector<1x8x1xf32>
    %103 = tpu.reciprocal %102 {approx = true} : vector<1x8x1xf32> -> vector<1x8x1xf32>
    %104 = vector.broadcast %103 : vector<1x8x1xf32> to vector<1x8x8xf32>
    %105 = arith.mulf %100, %104 : vector<1x8x8xf32>
    %c0_70 = arith.constant 0 : index
    %c1_71 = arith.constant 1 : index
    %c0_72 = arith.constant 0 : index
    %c0_73 = arith.constant 0 : index
    %106 = vector.load %arg14[%c0_70, %c1_71, %c0_72, %c0_73] : memref<1x4x8x8xf32, #tpu.memory_space<vmem>>, vector<1x1x8x8xf32>
    %107 = vector.shape_cast %106 : vector<1x1x8x8xf32> to vector<1x8x8xf32>
    %108 = vector.shape_cast %105 : vector<1x8x8xf32> to vector<1x1x8x8xf32>
    tpu.vector_store %arg14[%c0_70, %c1_71, %c0_72, %c0_73], %108 {strides = array<i32>} : memref<1x4x8x8xf32, #tpu.memory_space<vmem>>, vector<1x1x8x8xf32>,
    %109 = arith.truncf %105 : vector<1x8x8xf32> to vector<1x8x8xbf16>
    %cst_74 = arith.constant dense<0.000000e+00> : vector<1x8x16xf32>
    %110 = tpu.matmul %109, %93, %cst_74 {dimension_numbers = #tpu.dot_dimension_numbers<[2], [1], [1], [2], [0, 0, 0, 1, 1, 2], [0], [0]>} : vector<1x8x8xbf16>, vector<1x8x16xbf16>, vector<1x8x16xf32> -> vector<1x8x16xf32>
    %111 = vector.shape_cast %110 : vector<1x8x16xf32> to vector<8x16xf32>
    %112 = arith.truncf %111 : vector<8x16xf32> to vector<8x16xbf16>
    %c1_75 = arith.constant 1 : index
    %c0_76 = arith.constant 0 : index
    %c0_77 = arith.constant 0 : index
    %113 = vector.load %arg11[%c1_75, %c0_76, %c0_77] : memref<4x16x32xbf16, #tpu.memory_space<vmem>>, vector<1x16x32xbf16>
    %114 = vector.shape_cast %113 : vector<1x16x32xbf16> to vector<16x32xbf16>
    %cst_78 = arith.constant dense<0.000000e+00> : vector<8x32xf32>
    %115 = tpu.matmul %112, %114, %cst_78 {dimension_numbers = #tpu.dot_dimension_numbers<[1], [0], [0], [1], [0, 0, 1, 1], [], []>} : vector<8x16xbf16>, vector<16x32xbf16>, vector<8x32xf32> -> vector<8x32xf32>
    %116 = arith.addf %64, %115 : vector<8x32xf32>
    %c2 = arith.constant 2 : index
    %c0_79 = arith.constant 0 : index
    %c0_80 = arith.constant 0 : index
    %117 = vector.load %arg5[%c2, %c0_79, %c0_80] : memref<4x32x16xbf16, #tpu.memory_space<vmem>>, vector<1x32x16xbf16>
    %118 = vector.shape_cast %117 : vector<1x32x16xbf16> to vector<32x16xbf16>
    %cst_81 = arith.constant dense<0.000000e+00> : vector<8x16xf32>
    %119 = tpu.matmul %2, %118, %cst_81 {dimension_numbers = #tpu.dot_dimension_numbers<[1], [0], [0], [1], [0, 0, 1, 1], [], []>} : vector<8x32xbf16>, vector<32x16xbf16>, vector<8x16xf32> -> vector<8x16xf32>
    %c2_82 = arith.constant 2 : index
    %c0_83 = arith.constant 0 : index
    %c0_84 = arith.constant 0 : index
    %120 = vector.load %arg6[%c2_82, %c0_83, %c0_84] : memref<4x1x16xf32, #tpu.memory_space<vmem>>, vector<1x1x16xf32>
    %121 = vector.shape_cast %120 : vector<1x1x16xf32> to vector<1x16xf32>
    %122 = vector.broadcast %121 : vector<1x16xf32> to vector<8x16xf32>
    %123 = arith.addf %119, %122 : vector<8x16xf32>
    %cst_85 = arith.constant 2.500000e-01 : f32
    %124 = vector.broadcast %cst_85 : f32 to vector<8x16xf32>
    %125 = arith.mulf %123, %124 : vector<8x16xf32>
    %c2_86 = arith.constant 2 : index
    %c0_87 = arith.constant 0 : index
    %c0_88 = arith.constant 0 : index
    %126 = vector.load %arg7[%c2_86, %c0_87, %c0_88] : memref<4x32x16xbf16, #tpu.memory_space<vmem>>, vector<1x32x16xbf16>
    %127 = vector.shape_cast %126 : vector<1x32x16xbf16> to vector<32x16xbf16>
    %cst_89 = arith.constant dense<0.000000e+00> : vector<8x16xf32>
    %128 = tpu.matmul %5, %127, %cst_89 {dimension_numbers = #tpu.dot_dimension_numbers<[1], [0], [0], [1], [0, 0, 1, 1], [], []>} : vector<8x32xbf16>, vector<32x16xbf16>, vector<8x16xf32> -> vector<8x16xf32>
    %c2_90 = arith.constant 2 : index
    %c0_91 = arith.constant 0 : index
    %c0_92 = arith.constant 0 : index
    %129 = vector.load %arg8[%c2_90, %c0_91, %c0_92] : memref<4x1x16xf32, #tpu.memory_space<vmem>>, vector<1x1x16xf32>
    %130 = vector.shape_cast %129 : vector<1x1x16xf32> to vector<1x16xf32>
    %131 = vector.broadcast %130 : vector<1x16xf32> to vector<8x16xf32>
    %132 = arith.addf %128, %131 : vector<8x16xf32>
    %c2_93 = arith.constant 2 : index
    %c0_94 = arith.constant 0 : index
    %c0_95 = arith.constant 0 : index
    %133 = vector.load %arg9[%c2_93, %c0_94, %c0_95] : memref<4x32x16xbf16, #tpu.memory_space<vmem>>, vector<1x32x16xbf16>
    %134 = vector.shape_cast %133 : vector<1x32x16xbf16> to vector<32x16xbf16>
    %cst_96 = arith.constant dense<0.000000e+00> : vector<8x16xf32>
    %135 = tpu.matmul %8, %134, %cst_96 {dimension_numbers = #tpu.dot_dimension_numbers<[1], [0], [0], [1], [0, 0, 1, 1], [], []>} : vector<8x32xbf16>, vector<32x16xbf16>, vector<8x16xf32> -> vector<8x16xf32>
    %c2_97 = arith.constant 2 : index
    %c0_98 = arith.constant 0 : index
    %c0_99 = arith.constant 0 : index
    %136 = vector.load %arg10[%c2_97, %c0_98, %c0_99] : memref<4x1x16xf32, #tpu.memory_space<vmem>>, vector<1x1x16xf32>
    %137 = vector.shape_cast %136 : vector<1x1x16xf32> to vector<1x16xf32>
    %138 = vector.broadcast %137 : vector<1x16xf32> to vector<8x16xf32>
    %139 = arith.addf %135, %138 : vector<8x16xf32>
    %140 = vector.shape_cast %125 : vector<8x16xf32> to vector<1x8x16xf32>
    %141 = arith.truncf %140 : vector<1x8x16xf32> to vector<1x8x16xbf16>
    %142 = vector.shape_cast %132 : vector<8x16xf32> to vector<1x8x16xf32>
    %143 = arith.truncf %142 : vector<1x8x16xf32> to vector<1x8x16xbf16>
    %144 = vector.shape_cast %139 : vector<8x16xf32> to vector<1x8x16xf32>
    %145 = arith.truncf %144 : vector<1x8x16xf32> to vector<1x8x16xbf16>
    %cst_100 = arith.constant dense<0.000000e+00> : vector<1x8x8xf32>
    %146 = tpu.matmul %141, %143, %cst_100 {dimension_numbers = #tpu.dot_dimension_numbers<[2], [2], [1], [1], [0, 0, 0, 1, 1, 1], [0], [0]>} : vector<1x8x16xbf16>, vector<1x8x16xbf16>, vector<1x8x8xf32> -> vector<1x8x8xf32>
    %147 = arith.addf %146, %11 : vector<1x8x8xf32>
    %cst_101 = arith.constant dense<0xFF800000> : vector<1x8xf32>
    %148 = vector.multi_reduction <maximumf>, %147, %cst_101 [2] : vector<1x8x8xf32> to vector<1x8xf32>
    %149 = vector.shape_cast %148 : vector<1x8xf32> to vector<1x8x1xf32>
    %150 = vector.broadcast %149 : vector<1x8x1xf32> to vector<1x8x8xf32>
    %151 = arith.subf %147, %150 : vector<1x8x8xf32>
    %152 = math.exp %151 : vector<1x8x8xf32>
    %cst_102 = arith.constant dense<0.000000e+00> : vector<1x8xf32>
    %153 = vector.multi_reduction <add>, %152, %cst_102 [2] : vector<1x8x8xf32> to vector<1x8xf32>
    %154 = vector.shape_cast %153 : vector<1x8xf32> to vector<1x8x1xf32>
    %155 = tpu.reciprocal %154 {approx = true} : vector<1x8x1xf32> -> vector<1x8x1xf32>
    %156 = vector.broadcast %155 : vector<1x8x1xf32> to vector<1x8x8xf32>
    %157 = arith.mulf %152, %156 : vector<1x8x8xf32>
    %c0_103 = arith.constant 0 : index
    %c2_104 = arith.constant 2 : index
    %c0_105 = arith.constant 0 : index
    %c0_106 = arith.constant 0 : index
    %158 = vector.load %arg14[%c0_103, %c2_104, %c0_105, %c0_106] : memref<1x4x8x8xf32, #tpu.memory_space<vmem>>, vector<1x1x8x8xf32>
    %159 = vector.shape_cast %158 : vector<1x1x8x8xf32> to vector<1x8x8xf32>
    %160 = vector.shape_cast %157 : vector<1x8x8xf32> to vector<1x1x8x8xf32>
    tpu.vector_store %arg14[%c0_103, %c2_104, %c0_105, %c0_106], %160 {strides = array<i32>} : memref<1x4x8x8xf32, #tpu.memory_space<vmem>>, vector<1x1x8x8xf32>,
    %161 = arith.truncf %157 : vector<1x8x8xf32> to vector<1x8x8xbf16>
    %cst_107 = arith.constant dense<0.000000e+00> : vector<1x8x16xf32>
    %162 = tpu.matmul %161, %145, %cst_107 {dimension_numbers = #tpu.dot_dimension_numbers<[2], [1], [1], [2], [0, 0, 0, 1, 1, 2], [0], [0]>} : vector<1x8x8xbf16>, vector<1x8x16xbf16>, vector<1x8x16xf32> -> vector<1x8x16xf32>
    %163 = vector.shape_cast %162 : vector<1x8x16xf32> to vector<8x16xf32>
    %164 = arith.truncf %163 : vector<8x16xf32> to vector<8x16xbf16>
    %c2_108 = arith.constant 2 : index
    %c0_109 = arith.constant 0 : index
    %c0_110 = arith.constant 0 : index
    %165 = vector.load %arg11[%c2_108, %c0_109, %c0_110] : memref<4x16x32xbf16, #tpu.memory_space<vmem>>, vector<1x16x32xbf16>
    %166 = vector.shape_cast %165 : vector<1x16x32xbf16> to vector<16x32xbf16>
    %cst_111 = arith.constant dense<0.000000e+00> : vector<8x32xf32>
    %167 = tpu.matmul %164, %166, %cst_111 {dimension_numbers = #tpu.dot_dimension_numbers<[1], [0], [0], [1], [0, 0, 1, 1], [], []>} : vector<8x16xbf16>, vector<16x32xbf16>, vector<8x32xf32> -> vector<8x32xf32>
    %168 = arith.addf %116, %167 : vector<8x32xf32>
    %c3 = arith.constant 3 : index
    %c0_112 = arith.constant 0 : index
    %c0_113 = arith.constant 0 : index
    %169 = vector.load %arg5[%c3, %c0_112, %c0_113] : memref<4x32x16xbf16, #tpu.memory_space<vmem>>, vector<1x32x16xbf16>
    %170 = vector.shape_cast %169 : vector<1x32x16xbf16> to vector<32x16xbf16>
    %cst_114 = arith.constant dense<0.000000e+00> : vector<8x16xf32>
    %171 = tpu.matmul %2, %170, %cst_114 {dimension_numbers = #tpu.dot_dimension_numbers<[1], [0], [0], [1], [0, 0, 1, 1], [], []>} : vector<8x32xbf16>, vector<32x16xbf16>, vector<8x16xf32> -> vector<8x16xf32>
    %c3_115 = arith.constant 3 : index
    %c0_116 = arith.constant 0 : index
    %c0_117 = arith.constant 0 : index
    %172 = vector.load %arg6[%c3_115, %c0_116, %c0_117] : memref<4x1x16xf32, #tpu.memory_space<vmem>>, vector<1x1x16xf32>
    %173 = vector.shape_cast %172 : vector<1x1x16xf32> to vector<1x16xf32>
    %174 = vector.broadcast %173 : vector<1x16xf32> to vector<8x16xf32>
    %175 = arith.addf %171, %174 : vector<8x16xf32>
    %cst_118 = arith.constant 2.500000e-01 : f32
    %176 = vector.broadcast %cst_118 : f32 to vector<8x16xf32>
    %177 = arith.mulf %175, %176 : vector<8x16xf32>
    %c3_119 = arith.constant 3 : index
    %c0_120 = arith.constant 0 : index
    %c0_121 = arith.constant 0 : index
    %178 = vector.load %arg7[%c3_119, %c0_120, %c0_121] : memref<4x32x16xbf16, #tpu.memory_space<vmem>>, vector<1x32x16xbf16>
    %179 = vector.shape_cast %178 : vector<1x32x16xbf16> to vector<32x16xbf16>
    %cst_122 = arith.constant dense<0.000000e+00> : vector<8x16xf32>
    %180 = tpu.matmul %5, %179, %cst_122 {dimension_numbers = #tpu.dot_dimension_numbers<[1], [0], [0], [1], [0, 0, 1, 1], [], []>} : vector<8x32xbf16>, vector<32x16xbf16>, vector<8x16xf32> -> vector<8x16xf32>
    %c3_123 = arith.constant 3 : index
    %c0_124 = arith.constant 0 : index
    %c0_125 = arith.constant 0 : index
    %181 = vector.load %arg8[%c3_123, %c0_124, %c0_125] : memref<4x1x16xf32, #tpu.memory_space<vmem>>, vector<1x1x16xf32>
    %182 = vector.shape_cast %181 : vector<1x1x16xf32> to vector<1x16xf32>
    %183 = vector.broadcast %182 : vector<1x16xf32> to vector<8x16xf32>
    %184 = arith.addf %180, %183 : vector<8x16xf32>
    %c3_126 = arith.constant 3 : index
    %c0_127 = arith.constant 0 : index
    %c0_128 = arith.constant 0 : index
    %185 = vector.load %arg9[%c3_126, %c0_127, %c0_128] : memref<4x32x16xbf16, #tpu.memory_space<vmem>>, vector<1x32x16xbf16>
    %186 = vector.shape_cast %185 : vector<1x32x16xbf16> to vector<32x16xbf16>
    %cst_129 = arith.constant dense<0.000000e+00> : vector<8x16xf32>
    %187 = tpu.matmul %8, %186, %cst_129 {dimension_numbers = #tpu.dot_dimension_numbers<[1], [0], [0], [1], [0, 0, 1, 1], [], []>} : vector<8x32xbf16>, vector<32x16xbf16>, vector<8x16xf32> -> vector<8x16xf32>
    %c3_130 = arith.constant 3 : index
    %c0_131 = arith.constant 0 : index
    %c0_132 = arith.constant 0 : index
    %188 = vector.load %arg10[%c3_130, %c0_131, %c0_132] : memref<4x1x16xf32, #tpu.memory_space<vmem>>, vector<1x1x16xf32>
    %189 = vector.shape_cast %188 : vector<1x1x16xf32> to vector<1x16xf32>
    %190 = vector.broadcast %189 : vector<1x16xf32> to vector<8x16xf32>
    %191 = arith.addf %187, %190 : vector<8x16xf32>
    %192 = vector.shape_cast %177 : vector<8x16xf32> to vector<1x8x16xf32>
    %193 = arith.truncf %192 : vector<1x8x16xf32> to vector<1x8x16xbf16>
    %194 = vector.shape_cast %184 : vector<8x16xf32> to vector<1x8x16xf32>
    %195 = arith.truncf %194 : vector<1x8x16xf32> to vector<1x8x16xbf16>
    %196 = vector.shape_cast %191 : vector<8x16xf32> to vector<1x8x16xf32>
    %197 = arith.truncf %196 : vector<1x8x16xf32> to vector<1x8x16xbf16>
    %cst_133 = arith.constant dense<0.000000e+00> : vector<1x8x8xf32>
    %198 = tpu.matmul %193, %195, %cst_133 {dimension_numbers = #tpu.dot_dimension_numbers<[2], [2], [1], [1], [0, 0, 0, 1, 1, 1], [0], [0]>} : vector<1x8x16xbf16>, vector<1x8x16xbf16>, vector<1x8x8xf32> -> vector<1x8x8xf32>
    %199 = arith.addf %198, %11 : vector<1x8x8xf32>
    %cst_134 = arith.constant dense<0xFF800000> : vector<1x8xf32>
    %200 = vector.multi_reduction <maximumf>, %199, %cst_134 [2] : vector<1x8x8xf32> to vector<1x8xf32>
    %201 = vector.shape_cast %200 : vector<1x8xf32> to vector<1x8x1xf32>
    %202 = vector.broadcast %201 : vector<1x8x1xf32> to vector<1x8x8xf32>
    %203 = arith.subf %199, %202 : vector<1x8x8xf32>
    %204 = math.exp %203 : vector<1x8x8xf32>
    %cst_135 = arith.constant dense<0.000000e+00> : vector<1x8xf32>
    %205 = vector.multi_reduction <add>, %204, %cst_135 [2] : vector<1x8x8xf32> to vector<1x8xf32>
    %206 = vector.shape_cast %205 : vector<1x8xf32> to vector<1x8x1xf32>
    %207 = tpu.reciprocal %206 {approx = true} : vector<1x8x1xf32> -> vector<1x8x1xf32>
    %208 = vector.broadcast %207 : vector<1x8x1xf32> to vector<1x8x8xf32>
    %209 = arith.mulf %204, %208 : vector<1x8x8xf32>
    %c0_136 = arith.constant 0 : index
    %c3_137 = arith.constant 3 : index
    %c0_138 = arith.constant 0 : index
    %c0_139 = arith.constant 0 : index
    %210 = vector.load %arg14[%c0_136, %c3_137, %c0_138, %c0_139] : memref<1x4x8x8xf32, #tpu.memory_space<vmem>>, vector<1x1x8x8xf32>
    %211 = vector.shape_cast %210 : vector<1x1x8x8xf32> to vector<1x8x8xf32>
    %212 = vector.shape_cast %209 : vector<1x8x8xf32> to vector<1x1x8x8xf32>
    tpu.vector_store %arg14[%c0_136, %c3_137, %c0_138, %c0_139], %212 {strides = array<i32>} : memref<1x4x8x8xf32, #tpu.memory_space<vmem>>, vector<1x1x8x8xf32>,
    %213 = arith.truncf %209 : vector<1x8x8xf32> to vector<1x8x8xbf16>
    %cst_140 = arith.constant dense<0.000000e+00> : vector<1x8x16xf32>
    %214 = tpu.matmul %213, %197, %cst_140 {dimension_numbers = #tpu.dot_dimension_numbers<[2], [1], [1], [2], [0, 0, 0, 1, 1, 2], [0], [0]>} : vector<1x8x8xbf16>, vector<1x8x16xbf16>, vector<1x8x16xf32> -> vector<1x8x16xf32>
    %215 = vector.shape_cast %214 : vector<1x8x16xf32> to vector<8x16xf32>
    %216 = arith.truncf %215 : vector<8x16xf32> to vector<8x16xbf16>
    %c3_141 = arith.constant 3 : index
    %c0_142 = arith.constant 0 : index
    %c0_143 = arith.constant 0 : index
    %217 = vector.load %arg11[%c3_141, %c0_142, %c0_143] : memref<4x16x32xbf16, #tpu.memory_space<vmem>>, vector<1x16x32xbf16>
    %218 = vector.shape_cast %217 : vector<1x16x32xbf16> to vector<16x32xbf16>
    %cst_144 = arith.constant dense<0.000000e+00> : vector<8x32xf32>
    %219 = tpu.matmul %216, %218, %cst_144 {dimension_numbers = #tpu.dot_dimension_numbers<[1], [0], [0], [1], [0, 0, 1, 1], [], []>} : vector<8x16xbf16>, vector<16x32xbf16>, vector<8x32xf32> -> vector<8x32xf32>
    %220 = arith.addf %168, %219 : vector<8x32xf32>
    %c0_145 = arith.constant 0 : index
    %c0_146 = arith.constant 0 : index
    %221 = vector.load %arg12[%c0_145, %c0_146] : memref<1x32xf32, #tpu.memory_space<vmem>>, vector<1x32xf32>
    %222 = vector.broadcast %221 : vector<1x32xf32> to vector<8x32xf32>
    %223 = arith.addf %220, %222 : vector<8x32xf32>
    %224 = vector.shape_cast %223 : vector<8x32xf32> to vector<1x8x32xf32>
    %c0_147 = arith.constant 0 : index
    %c0_148 = arith.constant 0 : index
    %c0_149 = arith.constant 0 : index
    %225 = vector.load %arg13[%c0_147, %c0_148, %c0_149] : memref<1x8x32xf32, #tpu.memory_space<vmem>>, vector<1x8x32xf32>
    tpu.vector_store %arg13[%c0_147, %c0_148, %c0_149], %224 {strides = array<i32>} : memref<1x8x32xf32, #tpu.memory_space<vmem>>, vector<1x8x32xf32>,
    return
  }
  func.func @transform_0(%arg0: i32) -> (i32, i32, i32) {
    %c0_i32 = arith.constant 0 : i32
    %c0_i32_0 = arith.constant 0 : i32
    %c0_i32_1 = arith.constant 0 : i32
    return %arg0, %c0_i32, %c0_i32_0 : i32, i32, i32
  }
  func.func @transform_1(%arg0: i32) -> (i32, i32, i32) {
    %c0_i32 = arith.constant 0 : i32
    %c0_i32_0 = arith.constant 0 : i32
    %c0_i32_1 = arith.constant 0 : i32
    return %arg0, %c0_i32, %c0_i32_0 : i32, i32, i32
  }
  func.func @transform_2(%arg0: i32) -> (i32, i32, i32) {
    %c0_i32 = arith.constant 0 : i32
    %c0_i32_0 = arith.constant 0 : i32
    %c0_i32_1 = arith.constant 0 : i32
    return %arg0, %c0_i32, %c0_i32_0 : i32, i32, i32
  }
  func.func @transform_3(%arg0: i32) -> (i32, i32, i32) {
    %c0_i32 = arith.constant 0 : i32
    %c0_i32_0 = arith.constant 0 : i32
    %c0_i32_1 = arith.constant 0 : i32
    return %arg0, %c0_i32, %c0_i32_0 : i32, i32, i32
  }
  func.func @transform_4(%arg0: i32) -> (i32, i32, i32) {
    %c0_i32 = arith.constant 0 : i32
    %c0_i32_0 = arith.constant 0 : i32
    %c0_i32_1 = arith.constant 0 : i32
    %c0_i32_2 = arith.constant 0 : i32
    return %c0_i32, %c0_i32_0, %c0_i32_1 : i32, i32, i32
  }
  func.func @transform_5(%arg0: i32) -> (i32, i32, i32) {
    %c0_i32 = arith.constant 0 : i32
    %c0_i32_0 = arith.constant 0 : i32
    %c0_i32_1 = arith.constant 0 : i32
    %c0_i32_2 = arith.constant 0 : i32
    return %c0_i32, %c0_i32_0, %c0_i32_1 : i32, i32, i32
  }
  func.func @transform_6(%arg0: i32) -> (i32, i32, i32) {
    %c0_i32 = arith.constant 0 : i32
    %c0_i32_0 = arith.constant 0 : i32
    %c0_i32_1 = arith.constant 0 : i32
    %c0_i32_2 = arith.constant 0 : i32
    return %c0_i32, %c0_i32_0, %c0_i32_1 : i32, i32, i32
  }
  func.func @transform_7(%arg0: i32) -> (i32, i32, i32) {
    %c0_i32 = arith.constant 0 : i32
    %c0_i32_0 = arith.constant 0 : i32
    %c0_i32_1 = arith.constant 0 : i32
    %c0_i32_2 = arith.constant 0 : i32
    return %c0_i32, %c0_i32_0, %c0_i32_1 : i32, i32, i32
  }
  func.func @transform_8(%arg0: i32) -> (i32, i32, i32) {
    %c0_i32 = arith.constant 0 : i32
    %c0_i32_0 = arith.constant 0 : i32
    %c0_i32_1 = arith.constant 0 : i32
    %c0_i32_2 = arith.constant 0 : i32
    return %c0_i32, %c0_i32_0, %c0_i32_1 : i32, i32, i32
  }
  func.func @transform_9(%arg0: i32) -> (i32, i32, i32) {
    %c0_i32 = arith.constant 0 : i32
    %c0_i32_0 = arith.constant 0 : i32
    %c0_i32_1 = arith.constant 0 : i32
    %c0_i32_2 = arith.constant 0 : i32
    return %c0_i32, %c0_i32_0, %c0_i32_1 : i32, i32, i32
  }
  func.func @transform_10(%arg0: i32) -> (i32, i32, i32) {
    %c0_i32 = arith.constant 0 : i32
    %c0_i32_0 = arith.constant 0 : i32
    %c0_i32_1 = arith.constant 0 : i32
    %c0_i32_2 = arith.constant 0 : i32
    return %c0_i32, %c0_i32_0, %c0_i32_1 : i32, i32, i32
  }
  func.func @transform_11(%arg0: i32) -> (i32, i32) {
    %c0_i32 = arith.constant 0 : i32
    %c0_i32_0 = arith.constant 0 : i32
    %c0_i32_1 = arith.constant 0 : i32
    return %c0_i32, %c0_i32_0 : i32, i32
  }
  func.func @transform_12(%arg0: i32) -> (i32, i32, i32) {
    %c0_i32 = arith.constant 0 : i32
    %c0_i32_0 = arith.constant 0 : i32
    %c0_i32_1 = arith.constant 0 : i32
    return %arg0, %c0_i32, %c0_i32_0 : i32, i32, i32
  }
  func.func @transform_13(%arg0: i32) -> (i32, i32, i32, i32) {
    %c0_i32 = arith.constant 0 : i32
    %c0_i32_0 = arith.constant 0 : i32
    %c0_i32_1 = arith.constant 0 : i32
    %c0_i32_2 = arith.constant 0 : i32
    return %arg0, %c0_i32, %c0_i32_0, %c0_i32_1 : i32, i32, i32, i32
  }
}

</mosaic_0001>

<llo_original>
// kernel: tpu_custom_call.1
$region0: #{tpu_custom_call.1}
  #allocation0 [shape = 'u32[]', space=smem, size = 0x4, offset = 0x4, fixed_abs, tag = 'smem constant byte address 0x4 - core index']
  #allocation1 [shape = 'u32[144,128]{1,0:T(1,128)}', space=vmem, size = 0x12000, scoped, tag = 'internal scratch']
  %s0 = inlined_call_operand.vmem [shape: f32[2,8,32], index: 0, kind: input, shape index: {}]
  %s1 = inlined_call_operand.vmem [shape: f32[2,8,32], index: 1, kind: input, shape index: {}]
  %s2 = inlined_call_operand.vmem [shape: f32[2,8,32], index: 2, kind: input, shape index: {}]
  %s3 = inlined_call_operand.vmem [shape: f32[2,8,8], index: 3, kind: input, shape index: {}]
  %s4 = inlined_call_operand.vmem [shape: bf16[4,32,16], index: 4, kind: input, shape index: {}]
  %s5 = inlined_call_operand.vmem [shape: f32[4,1,16], index: 5, kind: input, shape index: {}]
  %s6 = inlined_call_operand.vmem [shape: bf16[4,32,16], index: 6, kind: input, shape index: {}]
  %s7 = inlined_call_operand.vmem [shape: f32[4,1,16], index: 7, kind: input, shape index: {}]
  %s8 = inlined_call_operand.vmem [shape: bf16[4,32,16], index: 8, kind: input, shape index: {}]
  %s9 = inlined_call_operand.vmem [shape: f32[4,1,16], index: 9, kind: input, shape index: {}]
  %s10 = inlined_call_operand.vmem [shape: bf16[4,16,32], index: 10, kind: input, shape index: {}]
  %s11 = inlined_call_operand.vmem [shape: f32[1,32], index: 11, kind: input, shape index: {}]
  %s12 = inlined_call_operand.hbm [shape: f32[2,8,32], index: 12, kind: output, shape index: {0}]
  %s13 = inlined_call_operand.hbm [shape: f32[2,4,8,8], index: 13, kind: output, shape index: {1}]
  %14 = xla_tuple %s12, %s13
  %s15 = sld [smem:[#allocation0]]
  $region89: #{tpu_custom_call.1} parent=0
    _
  %s17 = ssub.s32 1, %s15
  %s18 = scalar_select 0, %s17, %s15
  $region1: #{tpu_custom_call.1} parent=0
    #allocation2 [shape = 'u8[8192]{0}', space=vmem, size = 0x2000, scoped, tag = 'output window, operand 0']
    #allocation3 [shape = 's32[2]{0}', space=sflag, size = 0x8, scoped, tag = 'scoped memory for tpu_custom_call.1']
    #allocation4 [shape = 'u8[32768]{0}', space=vmem, size = 0x8000, scoped, tag = 'output window, operand 1']
    #allocation5 [shape = 's32[2]{0}', space=sflag, size = 0x8, scoped, tag = 'scoped memory for tpu_custom_call.1']
    %19 = vsyncpa [#allocation3], 0
    %s20 = scalar_lea.sflag [#allocation3], 1
    %21 = vsyncpa %s20, 0
    %22 = vsyncpa [#allocation5], 0
    %s23 = scalar_lea.sflag [#allocation5], 1
    %24 = vsyncpa %s23, 0
    loop: start=0, step=1, limit=4
    $region2: #{tpu_custom_call.1} parent=1 // loop_pre_header
      _
    $region3: #{tpu_custom_call.1} parent=1 // loop_header
      %s26 = sphi 0, %s30
      %p27 = scmp.ge.s32.totalorder %s26, 4
      %s36 = sphi 0, %s38
      %s39 = sphi 0, %s36
      %s40 = sphi 0, %s39
      %s56 = sphi 0, %s40
      %s62 = sphi 0, %s64
      %s65 = sphi 0, %s62
      %s66 = sphi 0, %s65
      %s82 = sphi 0, %s66
      %s88 = sphi 0, %s90
      %s91 = sphi 0, %s88
      %s92 = sphi 0, %s91
      %s108 = sphi 0, %s92
      %s114 = sphi 0, %s116
      %s117 = sphi 0, %s114
      %s118 = sphi 0, %s117
      %s134 = sphi 0, %s118
      %s138 = sphi 0, %s138
      %s140 = sphi 0, %s138
      %s141 = sphi 0, %s140
      %s155 = sphi 0, %s141
      %s159 = sphi 0, %s159
      %s161 = sphi 0, %s159
      %s162 = sphi 0, %s161
      %s176 = sphi 0, %s162
      %s180 = sphi 0, %s180
      %s182 = sphi 0, %s180
      %s183 = sphi 0, %s182
      %s197 = sphi 0, %s183
      %s201 = sphi 0, %s201
      %s203 = sphi 0, %s201
      %s204 = sphi 0, %s203
      %s218 = sphi 0, %s204
      %s222 = sphi 0, %s222
      %s224 = sphi 0, %s222
      %s225 = sphi 0, %s224
      %s239 = sphi 0, %s225
      %s243 = sphi 0, %s243
      %s245 = sphi 0, %s243
      %s246 = sphi 0, %s245
      %s260 = sphi 0, %s246
      %s264 = sphi 0, %s264
      %s266 = sphi 0, %s264
      %s267 = sphi 0, %s266
      %s281 = sphi 0, %s267
      %s285 = sphi 0, %s285
      %s287 = sphi 0, %s285
      %s288 = sphi 0, %s287
      %s302 = sphi 0, %s288
      %s308 = sphi 0, %s310
      %s311 = sphi 0, %s308
      %s312 = sphi 0, %s311
      %s328 = sphi 0, %s312
      %s334 = sphi 0, %s336
      %s337 = sphi 0, %s334
      %s338 = sphi 0, %s337
      %s354 = sphi 0, %s338
    $region4: #{tpu_custom_call.1} parent=1 // loop_header_branch
      %29 = sbr.rel (%p27) target = $region8
    $region5: #{tpu_custom_call.1} parent=1 // loop_body
      %s31 = ssub.s32 %s26, 1
      %s32 = ssub.s32 %s26, 2
      %s33 = sadd.s32 %s26, 1
      %s34 = ssub.s32 %s26, %s33
      %p35 = scmp.eq.s32.totalorder %s34, 0
      %s37 = sadd.s32 %s36, 1
      %s38 = scalar_select %p35, %s36, %s37
      %p41 = pneg %p35
      %p42 = scmp.eq.s32.totalorder %s26, 1
      %p43 = por %p41, %p42
      %p44 = scmp.ne.s32.totalorder %s36, %s39
      %p45 = scmp.eq.s32.totalorder %s26, 0
      %p46 = por %p44, %p45
      %p47 = scmp.ne.s32.totalorder %s36, %s39
      %p48 = scmp.eq.s32.totalorder %s31, 1
      %p49 = por %p47, %p48
      %p50 = scmp.ne.s32.totalorder %s39, %s40
      %p51 = scmp.eq.s32.totalorder %s31, 0
      %p52 = por %p50, %p51
      %p53 = scmp.ne.s32.totalorder %s39, %s40
      %p54 = scmp.eq.s32.totalorder %s32, 1
      %p55 = por %p53, %p54
      %p57 = scmp.ne.s32.totalorder %s40, %s56
      %p58 = scmp.eq.s32.totalorder %s32, 0
      %p59 = por %p57, %p58
      %s60 = ssub.s32 %s26, %s33
      %p61 = scmp.eq.s32.totalorder %s60, 0
      %s63 = sadd.s32 %s62, 1
      %s64 = scalar_select %p61, %s62, %s63
      %p67 = pneg %p61
      %p68 = scmp.eq.s32.totalorder %s26, 1
      %p69 = por %p67, %p68
      %p70 = scmp.ne.s32.totalorder %s62, %s65
      %p71 = scmp.eq.s32.totalorder %s26, 0
      %p72 = por %p70, %p71
      %p73 = scmp.ne.s32.totalorder %s62, %s65
      %p74 = scmp.eq.s32.totalorder %s31, 1
      %p75 = por %p73, %p74
      %p76 = scmp.ne.s32.totalorder %s65, %s66
      %p77 = scmp.eq.s32.totalorder %s31, 0
      %p78 = por %p76, %p77
      %p79 = scmp.ne.s32.totalorder %s65, %s66
      %p80 = scmp.eq.s32.totalorder %s32, 1
      %p81 = por %p79, %p80
      %p83 = scmp.ne.s32.totalorder %s66, %s82
      %p84 = scmp.eq.s32.totalorder %s32, 0
      %p85 = por %p83, %p84
      %s86 = ssub.s32 %s26, %s33
      %p87 = scmp.eq.s32.totalorder %s86, 0
      %s89 = sadd.s32 %s88, 1
      %s90 = scalar_select %p87, %s88, %s89
      %p93 = pneg %p87
      %p94 = scmp.eq.s32.totalorder %s26, 1
      %p95 = por %p93, %p94
      %p96 = scmp.ne.s32.totalorder %s88, %s91
      %p97 = scmp.eq.s32.totalorder %s26, 0
      %p98 = por %p96, %p97
      %p99 = scmp.ne.s32.totalorder %s88, %s91
      %p100 = scmp.eq.s32.totalorder %s31, 1
      %p101 = por %p99, %p100
      %p102 = scmp.ne.s32.totalorder %s91, %s92
      %p103 = scmp.eq.s32.totalorder %s31, 0
      %p104 = por %p102, %p103
      %p105 = scmp.ne.s32.totalorder %s91, %s92
      %p106 = scmp.eq.s32.totalorder %s32, 1
      %p107 = por %p105, %p106
      %p109 = scmp.ne.s32.totalorder %s92, %s108
      %p110 = scmp.eq.s32.totalorder %s32, 0
      %p111 = por %p109, %p110
      %s112 = ssub.s32 %s26, %s33
      %p113 = scmp.eq.s32.totalorder %s112, 0
      %s115 = sadd.s32 %s114, 1
      %s116 = scalar_select %p113, %s114, %s115
      %p119 = pneg %p113
      %p120 = scmp.eq.s32.totalorder %s26, 1
      %p121 = por %p119, %p120
      %p122 = scmp.ne.s32.totalorder %s114, %s117
      %p123 = scmp.eq.s32.totalorder %s26, 0
      %p124 = por %p122, %p123
      %p125 = scmp.ne.s32.totalorder %s114, %s117
      %p126 = scmp.eq.s32.totalorder %s31, 1
      %p127 = por %p125, %p126
      %p128 = scmp.ne.s32.totalorder %s117, %s118
      %p129 = scmp.eq.s32.totalorder %s31, 0
      %p130 = por %p128, %p129
      %p131 = scmp.ne.s32.totalorder %s117, %s118
      %p132 = scmp.eq.s32.totalorder %s32, 1
      %p133 = por %p131, %p132
      %p135 = scmp.ne.s32.totalorder %s118, %s134
      %p136 = scmp.eq.s32.totalorder %s32, 0
      %p137 = por %p135, %p136
      %s139 = sadd.s32 %s138, 1
      %p142 = scmp.eq.s32.totalorder %s26, 1
      %p143 = scmp.ne.s32.totalorder %s138, %s140
      %p144 = scmp.eq.s32.totalorder %s26, 0
      %p145 = por %p143, %p144
      %p146 = scmp.ne.s32.totalorder %s138, %s140
      %p147 = scmp.eq.s32.totalorder %s31, 1
      %p148 = por %p146, %p147
      %p149 = scmp.ne.s32.totalorder %s140, %s141
      %p150 = scmp.eq.s32.totalorder %s31, 0
      %p151 = por %p149, %p150
      %p152 = scmp.ne.s32.totalorder %s140, %s141
      %p153 = scmp.eq.s32.totalorder %s32, 1
      %p154 = por %p152, %p153
      %p156 = scmp.ne.s32.totalorder %s141, %s155
      %p157 = scmp.eq.s32.totalorder %s32, 0
      %p158 = por %p156, %p157
      %s160 = sadd.s32 %s159, 1
      %p163 = scmp.eq.s32.totalorder %s26, 1
      %p164 = scmp.ne.s32.totalorder %s159, %s161
      %p165 = scmp.eq.s32.totalorder %s26, 0
      %p166 = por %p164, %p165
      %p167 = scmp.ne.s32.totalorder %s159, %s161
      %p168 = scmp.eq.s32.totalorder %s31, 1
      %p169 = por %p167, %p168
      %p170 = scmp.ne.s32.totalorder %s161, %s162
      %p171 = scmp.eq.s32.totalorder %s31, 0
      %p172 = por %p170, %p171
      %p173 = scmp.ne.s32.totalorder %s161, %s162
      %p174 = scmp.eq.s32.totalorder %s32, 1
      %p175 = por %p173, %p174
      %p177 = scmp.ne.s32.totalorder %s162, %s176
      %p178 = scmp.eq.s32.totalorder %s32, 0
      %p179 = por %p177, %p178
      %s181 = sadd.s32 %s180, 1
      %p184 = scmp.eq.s32.totalorder %s26, 1
      %p185 = scmp.ne.s32.totalorder %s180, %s182
      %p186 = scmp.eq.s32.totalorder %s26, 0
      %p187 = por %p185, %p186
      %p188 = scmp.ne.s32.totalorder %s180, %s182
      %p189 = scmp.eq.s32.totalorder %s31, 1
      %p190 = por %p188, %p189
      %p191 = scmp.ne.s32.totalorder %s182, %s183
      %p192 = scmp.eq.s32.totalorder %s31, 0
      %p193 = por %p191, %p192
      %p194 = scmp.ne.s32.totalorder %s182, %s183
      %p195 = scmp.eq.s32.totalorder %s32, 1
      %p196 = por %p194, %p195
      %p198 = scmp.ne.s32.totalorder %s183, %s197
      %p199 = scmp.eq.s32.totalorder %s32, 0
      %p200 = por %p198, %p199
      %s202 = sadd.s32 %s201, 1
      %p205 = scmp.eq.s32.totalorder %s26, 1
      %p206 = scmp.ne.s32.totalorder %s201, %s203
      %p207 = scmp.eq.s32.totalorder %s26, 0
      %p208 = por %p206, %p207
      %p209 = scmp.ne.s32.totalorder %s201, %s203
      %p210 = scmp.eq.s32.totalorder %s31, 1
      %p211 = por %p209, %p210
      %p212 = scmp.ne.s32.totalorder %s203, %s204
      %p213 = scmp.eq.s32.totalorder %s31, 0
      %p214 = por %p212, %p213
      %p215 = scmp.ne.s32.totalorder %s203, %s204
      %p216 = scmp.eq.s32.totalorder %s32, 1
      %p217 = por %p215, %p216
      %p219 = scmp.ne.s32.totalorder %s204, %s218
      %p220 = scmp.eq.s32.totalorder %s32, 0
      %p221 = por %p219, %p220
      %s223 = sadd.s32 %s222, 1
      %p226 = scmp.eq.s32.totalorder %s26, 1
      %p227 = scmp.ne.s32.totalorder %s222, %s224
      %p228 = scmp.eq.s32.totalorder %s26, 0
      %p229 = por %p227, %p228
      %p230 = scmp.ne.s32.totalorder %s222, %s224
      %p231 = scmp.eq.s32.totalorder %s31, 1
      %p232 = por %p230, %p231
      %p233 = scmp.ne.s32.totalorder %s224, %s225
      %p234 = scmp.eq.s32.totalorder %s31, 0
      %p235 = por %p233, %p234
      %p236 = scmp.ne.s32.totalorder %s224, %s225
      %p237 = scmp.eq.s32.totalorder %s32, 1
      %p238 = por %p236, %p237
      %p240 = scmp.ne.s32.totalorder %s225, %s239
      %p241 = scmp.eq.s32.totalorder %s32, 0
      %p242 = por %p240, %p241
      %s244 = sadd.s32 %s243, 1
      %p247 = scmp.eq.s32.totalorder %s26, 1
      %p248 = scmp.ne.s32.totalorder %s243, %s245
      %p249 = scmp.eq.s32.totalorder %s26, 0
      %p250 = por %p248, %p249
      %p251 = scmp.ne.s32.totalorder %s243, %s245
      %p252 = scmp.eq.s32.totalorder %s31, 1
      %p253 = por %p251, %p252
      %p254 = scmp.ne.s32.totalorder %s245, %s246
      %p255 = scmp.eq.s32.totalorder %s31, 0
      %p256 = por %p254, %p255
      %p257 = scmp.ne.s32.totalorder %s245, %s246
      %p258 = scmp.eq.s32.totalorder %s32, 1
      %p259 = por %p257, %p258
      %p261 = scmp.ne.s32.totalorder %s246, %s260
      %p262 = scmp.eq.s32.totalorder %s32, 0
      %p263 = por %p261, %p262
      %s265 = sadd.s32 %s264, 1
      %p268 = scmp.eq.s32.totalorder %s26, 1
      %p269 = scmp.ne.s32.totalorder %s264, %s266
      %p270 = scmp.eq.s32.totalorder %s26, 0
      %p271 = por %p269, %p270
      %p272 = scmp.ne.s32.totalorder %s264, %s266
      %p273 = scmp.eq.s32.totalorder %s31, 1
      %p274 = por %p272, %p273
      %p275 = scmp.ne.s32.totalorder %s266, %s267
      %p276 = scmp.eq.s32.totalorder %s31, 0
      %p277 = por %p275, %p276
      %p278 = scmp.ne.s32.totalorder %s266, %s267
      %p279 = scmp.eq.s32.totalorder %s32, 1
      %p280 = por %p278, %p279
      %p282 = scmp.ne.s32.totalorder %s267, %s281
      %p283 = scmp.eq.s32.totalorder %s32, 0
      %p284 = por %p282, %p283
      %s286 = sadd.s32 %s285, 1
      %p289 = scmp.eq.s32.totalorder %s26, 1
      %p290 = scmp.ne.s32.totalorder %s285, %s287
      %p291 = scmp.eq.s32.totalorder %s26, 0
      %p292 = por %p290, %p291
      %p293 = scmp.ne.s32.totalorder %s285, %s287
      %p294 = scmp.eq.s32.totalorder %s31, 1
      %p295 = por %p293, %p294
      %p296 = scmp.ne.s32.totalorder %s287, %s288
      %p297 = scmp.eq.s32.totalorder %s31, 0
      %p298 = por %p296, %p297
      %p299 = scmp.ne.s32.totalorder %s287, %s288
      %p300 = scmp.eq.s32.totalorder %s32, 1
      %p301 = por %p299, %p300
      %p303 = scmp.ne.s32.totalorder %s288, %s302
      %p304 = scmp.eq.s32.totalorder %s32, 0
      %p305 = por %p303, %p304
      %s306 = ssub.s32 %s26, %s33
      %p307 = scmp.eq.s32.totalorder %s306, 0
      %s309 = sadd.s32 %s308, 1
      %s310 = scalar_select %p307, %s308, %s309
      %p313 = pneg %p307
      %p314 = scmp.eq.s32.totalorder %s26, 1
      %p315 = por %p313, %p314
      %p316 = scmp.ne.s32.totalorder %s308, %s311
      %p317 = scmp.eq.s32.totalorder %s26, 0
      %p318 = por %p316, %p317
      %p319 = scmp.ne.s32.totalorder %s308, %s311
      %p320 = scmp.eq.s32.totalorder %s31, 1
      %p321 = por %p319, %p320
      %p322 = scmp.ne.s32.totalorder %s311, %s312
      %p323 = scmp.eq.s32.totalorder %s31, 0
      %p324 = por %p322, %p323
      %p325 = scmp.ne.s32.totalorder %s311, %s312
      %p326 = scmp.eq.s32.totalorder %s32, 1
      %p327 = por %p325, %p326
      %p329 = scmp.ne.s32.totalorder %s312, %s328
      %p330 = scmp.eq.s32.totalorder %s32, 0
      %p331 = por %p329, %p330
      %s332 = ssub.s32 %s26, %s33
      %p333 = scmp.eq.s32.totalorder %s332, 0
      %s335 = sadd.s32 %s334, 1
      %s336 = scalar_select %p333, %s334, %s335
      %p339 = pneg %p333
      %p340 = scmp.eq.s32.totalorder %s26, 1
      %p341 = por %p339, %p340
      %p342 = scmp.ne.s32.totalorder %s334, %s337
      %p343 = scmp.eq.s32.totalorder %s26, 0
      %p344 = por %p342, %p343
      %p345 = scmp.ne.s32.totalorder %s334, %s337
      %p346 = scmp.eq.s32.totalorder %s31, 1
      %p347 = por %p345, %p346
      %p348 = scmp.ne.s32.totalorder %s337, %s338
      %p349 = scmp.eq.s32.totalorder %s31, 0
      %p350 = por %p348, %p349
      %p351 = scmp.ne.s32.totalorder %s337, %s338
      %p352 = scmp.eq.s32.totalorder %s32, 1
      %p353 = por %p351, %p352
      %p355 = scmp.ne.s32.totalorder %s338, %s354
      %p356 = scmp.eq.s32.totalorder %s32, 0
      %p357 = por %p355, %p356
      %p358 = scmp.le.s32.totalorder 1, %s26
      %p359 = scmp.lt.s32.totalorder %s26, 3
      %p360 = pnand %p358, %p359
      %p361 = pneg %p360
      // Predicated region
      $region9: #{tpu_custom_call.1} parent=5 // pred_check
        _
      $region10: #{tpu_custom_call.1} parent=5 // pred_check_branch
        %363 = sbr.rel (%p360) target = $region12
      $region11: #{tpu_custom_call.1} parent=5 // pred_region
        %s364 = ssub.s32 %s26, 1
        // Predicated region
        $region13: #{tpu_custom_call.1} parent=11 // pred_check
          %p365 = pneg %p151
        $region14: #{tpu_custom_call.1} parent=11 // pred_check_branch
          %367 = sbr.rel (%p365) target = $region16
        $region15: #{tpu_custom_call.1} parent=11 // pred_region
          _
        $region16: #{tpu_custom_call.1} parent=11 // pred_fallthru
          _
        // Predicated region
        $region17: #{tpu_custom_call.1} parent=11 // pred_check
          %p368 = pneg %p172
        $region18: #{tpu_custom_call.1} parent=11 // pred_check_branch
          %370 = sbr.rel (%p368) target = $region20
        $region19: #{tpu_custom_call.1} parent=11 // pred_region
          _
        $region20: #{tpu_custom_call.1} parent=11 // pred_fallthru
          _
        // Predicated region
        $region21: #{tpu_custom_call.1} parent=11 // pred_check
          %p371 = pneg %p193
        $region22: #{tpu_custom_call.1} parent=11 // pred_check_branch
          %373 = sbr.rel (%p371) target = $region24
        $region23: #{tpu_custom_call.1} parent=11 // pred_region
          _
        $region24: #{tpu_custom_call.1} parent=11 // pred_fallthru
          _
        // Predicated region
        $region25: #{tpu_custom_call.1} parent=11 // pred_check
          %p374 = pneg %p214
        $region26: #{tpu_custom_call.1} parent=11 // pred_check_branch
          %376 = sbr.rel (%p374) target = $region28
        $region27: #{tpu_custom_call.1} parent=11 // pred_region
          _
        $region28: #{tpu_custom_call.1} parent=11 // pred_fallthru
          _
        // Predicated region
        $region29: #{tpu_custom_call.1} parent=11 // pred_check
          %p377 = pneg %p235
        $region30: #{tpu_custom_call.1} parent=11 // pred_check_branch
          %379 = sbr.rel (%p377) target = $region32
        $region31: #{tpu_custom_call.1} parent=11 // pred_region
          _
        $region32: #{tpu_custom_call.1} parent=11 // pred_fallthru
          _
        // Predicated region
        $region33: #{tpu_custom_call.1} parent=11 // pred_check
          %p380 = pneg %p256
        $region34: #{tpu_custom_call.1} parent=11 // pred_check_branch
          %382 = sbr.rel (%p380) target = $region36
        $region35: #{tpu_custom_call.1} parent=11 // pred_region
          _
        $region36: #{tpu_custom_call.1} parent=11 // pred_fallthru
          _
        // Predicated region
        $region37: #{tpu_custom_call.1} parent=11 // pred_check
          %p383 = pneg %p277
        $region38: #{tpu_custom_call.1} parent=11 // pred_check_branch
          %385 = sbr.rel (%p383) target = $region40
        $region39: #{tpu_custom_call.1} parent=11 // pred_region
          _
        $region40: #{tpu_custom_call.1} parent=11 // pred_fallthru
          _
        // Predicated region
        $region41: #{tpu_custom_call.1} parent=11 // pred_check
          %p386 = pneg %p298
        $region42: #{tpu_custom_call.1} parent=11 // pred_check_branch
          %388 = sbr.rel (%p386) target = $region44
        $region43: #{tpu_custom_call.1} parent=11 // pred_region
          _
        $region44: #{tpu_custom_call.1} parent=11 // pred_fallthru
          _
      $region12: #{tpu_custom_call.1} parent=5 // pred_fallthru
        _
      %p389 = scmp.lt.s32.totalorder %s26, 2
      // Predicated region
      $region45: #{tpu_custom_call.1} parent=5 // pred_check
        %p390 = pneg %p389
      $region46: #{tpu_custom_call.1} parent=5 // pred_check_branch
        %392 = sbr.rel (%p390) target = $region48
      $region47: #{tpu_custom_call.1} parent=5 // pred_region
        // Predicated region
        $region49: #{tpu_custom_call.1} parent=47 // pred_check
          %p393 = pneg %p46
        $region50: #{tpu_custom_call.1} parent=47 // pred_check_branch
          %395 = sbr.rel (%p393) target = $region52
        $region51: #{tpu_custom_call.1} parent=47 // pred_region
          %p396 = scmp.lt.s32.totalorder %s26, 1
          %s397 = scalar_select %p396, %s26, 1
          %s398 = smul.addr %s397, 8
          %s399 = scalar_lea.vmem %s0, %s398
        $region52: #{tpu_custom_call.1} parent=47 // pred_fallthru
          _
        // Predicated region
        $region53: #{tpu_custom_call.1} parent=47 // pred_check
          %p400 = pneg %p72
        $region54: #{tpu_custom_call.1} parent=47 // pred_check_branch
          %402 = sbr.rel (%p400) target = $region56
        $region55: #{tpu_custom_call.1} parent=47 // pred_region
          %p403 = scmp.lt.s32.totalorder %s26, 1
          %s404 = scalar_select %p403, %s26, 1
          %s405 = smul.addr %s404, 8
          %s406 = scalar_lea.vmem %s1, %s405
        $region56: #{tpu_custom_call.1} parent=47 // pred_fallthru
          _
        // Predicated region
        $region57: #{tpu_custom_call.1} parent=47 // pred_check
          %p407 = pneg %p98
        $region58: #{tpu_custom_call.1} parent=47 // pred_check_branch
          %409 = sbr.rel (%p407) target = $region60
        $region59: #{tpu_custom_call.1} parent=47 // pred_region
          %p410 = scmp.lt.s32.totalorder %s26, 1
          %s411 = scalar_select %p410, %s26, 1
          %s412 = smul.addr %s411, 8
          %s413 = scalar_lea.vmem %s2, %s412
        $region60: #{tpu_custom_call.1} parent=47 // pred_fallthru
          _
        // Predicated region
        $region61: #{tpu_custom_call.1} parent=47 // pred_check
          %p414 = pneg %p124
        $region62: #{tpu_custom_call.1} parent=47 // pred_check_branch
          %416 = sbr.rel (%p414) target = $region64
        $region63: #{tpu_custom_call.1} parent=47 // pred_region
          %p417 = scmp.lt.s32.totalorder %s26, 1
          %s418 = scalar_select %p417, %s26, 1
          %s419 = smul.addr %s418, 8
          %s420 = scalar_lea.vmem %s3, %s419
        $region64: #{tpu_custom_call.1} parent=47 // pred_fallthru
          _
      $region48: #{tpu_custom_call.1} parent=5 // pred_fallthru
        _
      %p421 = scmp.le.s32.totalorder 1, %s26
      %p422 = scmp.lt.s32.totalorder %s26, 3
      %p423 = pnand %p421, %p422
      %p424 = pneg %p423
      // Predicated region
      $region65: #{tpu_custom_call.1} parent=5 // pred_check
        _
      $region66: #{tpu_custom_call.1} parent=5 // pred_check_branch
        %426 = sbr.rel (%p423) target = $region68
      $region67: #{tpu_custom_call.1} parent=5 // pred_region
        %s427 = ssub.s32 %s26, 1
        %p428 = scmp.lt.s32.totalorder %s31, 1
        %s429 = scalar_select %p428, %s31, 1
        %s430 = smul.addr %s429, 8
        %s431 = scalar_lea.vmem %s0, %s430
        %p432 = pneg %p52
        %p433 = pneg %p49
        %p434 = scmp.lt.s32.totalorder %s31, 1
        %s435 = scalar_select %p434, %s31, 1
        %s436 = smul.addr %s435, 8
        %s437 = scalar_lea.vmem %s1, %s436
        %p438 = pneg %p78
        %p439 = pneg %p75
        %p440 = scmp.lt.s32.totalorder %s31, 1
        %s441 = scalar_select %p440, %s31, 1
        %s442 = smul.addr %s441, 8
        %s443 = scalar_lea.vmem %s2, %s442
        %p444 = pneg %p104
        %p445 = pneg %p101
        %p446 = scmp.lt.s32.totalorder %s31, 1
        %s447 = scalar_select %p446, %s31, 1
        %s448 = smul.addr %s447, 8
        %s449 = scalar_lea.vmem %s3, %s448
        %p450 = pneg %p130
        %p451 = pneg %p127
        %p452 = pneg %p151
        %p453 = pneg %p148
        %p454 = pneg %p172
        %p455 = pneg %p169
        %p456 = pneg %p193
        %p457 = pneg %p190
        %p458 = pneg %p214
        %p459 = pneg %p211
        %p460 = pneg %p235
        %p461 = pneg %p232
        %p462 = pneg %p256
        %p463 = pneg %p253
        %p464 = pneg %p277
        %p465 = pneg %p274
        %p466 = pneg %p298
        %p467 = pneg %p295
        %p468 = pneg %p324
        %p469 = pneg %p321
        %s470 = sand.u32 %s311, 1
        %s471 = scalar_lea.sflag [#allocation3], %s470
        %s472 = sand.u32 %s311, 1
        %s473 = smul.addr %s472, 8
        %s474 = scalar_lea.vmem [#allocation2], %s473
        %p475 = pneg %p350
        %p476 = pneg %p347
        %s477 = sand.u32 %s337, 1
        %s478 = scalar_lea.sflag [#allocation5], %s477
        %s479 = sand.u32 %s337, 1
        %s480 = smul.addr %s479, 32
        %s481 = scalar_lea.vmem [#allocation4], %s480
        %p482 = scmp.lt.s32.totalorder %s31, 1
        %s483 = scalar_select %p482, %s31, 1
        %s484 = smul.addr %s483, 8
        %s485 = scalar_lea.vmem %s0, %s484
        %p486 = scmp.lt.s32.totalorder %s31, 1
        %s487 = scalar_select %p486, %s31, 1
        %s488 = smul.addr %s487, 8
        %s489 = scalar_lea.vmem %s1, %s488
        %p490 = scmp.lt.s32.totalorder %s31, 1
        %s491 = scalar_select %p490, %s31, 1
        %s492 = smul.addr %s491, 8
        %s493 = scalar_lea.vmem %s2, %s492
        %p494 = scmp.lt.s32.totalorder %s31, 1
        %s495 = scalar_select %p494, %s31, 1
        %s496 = smul.addr %s495, 8
        %s497 = scalar_lea.vmem %s3, %s496
        %v499 = vld [vmem:[%s485] sm:$0xff]
        %v500 = vpack.c.bf16 %v499, %v499
        %v501 = vld [vmem:[%s489] sm:$0xff]
        %v502 = vpack.c.bf16 %v501, %v501
        %v503 = vld [vmem:[%s493] sm:$0xff]
        %v504 = vpack.c.bf16 %v503, %v503
        %v505 = vld [vmem:[%s497] sm:$0xff]
        %v506 = vmul.f32 %v505, -10000.0
        %v507 = vld [vmem:[%s4] sm:$0xf]
        %v508 = vld [vmem:[%s4 + $0x4] sm:$0xf]
        %v509 = vld [vmem:[%s4 + $0x8] sm:$0xf]
        %v510 = vld [vmem:[%s4 + $0xc] sm:$0xf]
        %v511 = vld [vmem:[%s5] sm:$0x1]
        %v513 = vlaneseq
        %v514 = vshrl.u32 %v513, 7
        %v515 = vsub.s32 0, %v514
        %v516 = vrot.slane %v511, %v515
        %v522 = vunpack.c.l.b16 %v507
        %v523 = vunpack.c.l.b16 %v508
        %v524 = vunpack.c.l.b16 %v509
        %v525 = vunpack.c.l.b16 %v510
        %v526 = vpack.c.b16 %v523, %v522
        %v527 = vpack.c.b16 %v525, %v524
        %vm530 = vcmask 261120
        %v532 = vsel %vm530, %v500, 0
        %534 = vmatprep.subr.bf16.mxu0 0
        %535 = vmatpush1.bf16.msra.mxu0 %v526
        %536 = vmatprep.subr.bf16.mxu0 0
        %537 = vmatpush1.bf16.msra.mxu0 %v527
        %538 = vmatprep.subr.bf16.mxu0 0
        %539 = vmatpush1.bf16.msra.mxu0 0
        %540 = vmatprep.subr.bf16.mxu0 0
        %541 = vmatpush1.bf16.msra.mxu0 0
        %542 = vmatprep.subr.bf16.mxu0 0
        %543 = vmatpush1.bf16.msra.mxu0 0
        %544 = vmatprep.subr.bf16.mxu0 0
        %545 = vmatpush1.bf16.msra.mxu0 0
        %546 = vmatprep.subr.bf16.mxu0 0
        %547 = vmatpush1.bf16.msra.mxu0 0
        %548 = vmatprep.subr.bf16.mxu0 0
        %549 = vmatpush1.bf16.msra.mxu0 0
        %550 = vmatprep.subr.bf16.mxu0 0
        %551 = vmatpush1.bf16.msra.mxu0 0
        %552 = vmatprep.subr.bf16.mxu0 0
        %553 = vmatpush1.bf16.msra.mxu0 0
        %554 = vmatprep.subr.bf16.mxu0 0
        %555 = vmatpush1.bf16.msra.mxu0 0
        %556 = vmatprep.subr.bf16.mxu0 0
        %557 = vmatpush1.bf16.msra.mxu0 0
        %558 = vmatprep.subr.bf16.mxu0 0
        %559 = vmatpush1.bf16.msra.mxu0 0
        %560 = vmatprep.subr.bf16.mxu0 0
        %561 = vmatpush1.bf16.msra.mxu0 0
        %562 = vmatprep.subr.bf16.mxu0 0
        %563 = vmatpush1.bf16.msra.mxu0 0
        %564 = vmatprep.subr.bf16.mxu0 0
        %565 = vmatpush1.bf16.msra.mxu0 0
        %566 = vmatprep.mubr.bf16.mxu0 0
        %567 = vmatmul.mubr.bf16.gmra.mrb[0].mxu0 %v532
        %v568 = vpop.f32.mrb[0].mxu0
        %v569 = vadd.f32 %v516, %v568
        %v570 = vpop.f32.mrb[0].mxu0
        %v571 = vpop.f32.mrb[0].mxu0
        %v572 = vpop.f32.mrb[0].mxu0
        %573 = vdwg.mxu0
        %v574 = vmul.f32 %v569, 0.25
        %v575 = vld [vmem:[%s6] sm:$0xf]
        %v576 = vld [vmem:[%s6 + $0x4] sm:$0xf]
        %v577 = vld [vmem:[%s6 + $0x8] sm:$0xf]
        %v578 = vld [vmem:[%s6 + $0xc] sm:$0xf]
        %v579 = vld [vmem:[%s7] sm:$0x1]
        %v581 = vlaneseq
        %v582 = vshrl.u32 %v581, 7
        %v583 = vsub.s32 0, %v582
        %v584 = vrot.slane %v579, %v583
        %v590 = vunpack.c.l.b16 %v575
        %v591 = vunpack.c.l.b16 %v576
        %v592 = vunpack.c.l.b16 %v577
        %v593 = vunpack.c.l.b16 %v578
        %v594 = vpack.c.b16 %v591, %v590
        %v595 = vpack.c.b16 %v593, %v592
        %v599 = vsel %vm530, %v502, 0
        %601 = vmatprep.subr.bf16.mxu0 0
        %602 = vmatpush1.bf16.msra.mxu0 %v594
        %603 = vmatprep.subr.bf16.mxu0 0
        %604 = vmatpush1.bf16.msra.mxu0 %v595
        %605 = vmatprep.subr.bf16.mxu0 0
        %606 = vmatpush1.bf16.msra.mxu0 0
        %607 = vmatprep.subr.bf16.mxu0 0
        %608 = vmatpush1.bf16.msra.mxu0 0
        %609 = vmatprep.subr.bf16.mxu0 0
        %610 = vmatpush1.bf16.msra.mxu0 0
        %611 = vmatprep.subr.bf16.mxu0 0
        %612 = vmatpush1.bf16.msra.mxu0 0
        %613 = vmatprep.subr.bf16.mxu0 0
        %614 = vmatpush1.bf16.msra.mxu0 0
        %615 = vmatprep.subr.bf16.mxu0 0
        %616 = vmatpush1.bf16.msra.mxu0 0
        %617 = vmatprep.subr.bf16.mxu0 0
        %618 = vmatpush1.bf16.msra.mxu0 0
        %619 = vmatprep.subr.bf16.mxu0 0
        %620 = vmatpush1.bf16.msra.mxu0 0
        %621 = vmatprep.subr.bf16.mxu0 0
        %622 = vmatpush1.bf16.msra.mxu0 0
        %623 = vmatprep.subr.bf16.mxu0 0
        %624 = vmatpush1.bf16.msra.mxu0 0
        %625 = vmatprep.subr.bf16.mxu0 0
        %626 = vmatpush1.bf16.msra.mxu0 0
        %627 = vmatprep.subr.bf16.mxu0 0
        %628 = vmatpush1.bf16.msra.mxu0 0
        %629 = vmatprep.subr.bf16.mxu0 0
        %630 = vmatpush1.bf16.msra.mxu0 0
        %631 = vmatprep.subr.bf16.mxu0 0
        %632 = vmatpush1.bf16.msra.mxu0 0
        %633 = vmatprep.mubr.bf16.mxu0 0
        %634 = vmatmul.mubr.bf16.gmra.mrb[0].mxu0 %v599
        %v635 = vpop.f32.mrb[0].mxu0
        %v636 = vadd.f32 %v584, %v635
        %v637 = vpop.f32.mrb[0].mxu0
        %v638 = vpop.f32.mrb[0].mxu0
        %v639 = vpop.f32.mrb[0].mxu0
        %640 = vdwg.mxu0
        %v641 = vld [vmem:[%s8] sm:$0xf]
        %v642 = vld [vmem:[%s8 + $0x4] sm:$0xf]
        %v643 = vld [vmem:[%s8 + $0x8] sm:$0xf]
        %v644 = vld [vmem:[%s8 + $0xc] sm:$0xf]
        %v645 = vld [vmem:[%s9] sm:$0x1]
        %v647 = vlaneseq
        %v648 = vshrl.u32 %v647, 7
        %v649 = vsub.s32 0, %v648
        %v650 = vrot.slane %v645, %v649
        %v656 = vunpack.c.l.b16 %v641
        %v657 = vunpack.c.l.b16 %v642
        %v658 = vunpack.c.l.b16 %v643
        %v659 = vunpack.c.l.b16 %v644
        %v660 = vpack.c.b16 %v657, %v656
        %v661 = vpack.c.b16 %v659, %v658
        %v665 = vsel %vm530, %v504, 0
        %667 = vmatprep.subr.bf16.mxu0 0
        %668 = vmatpush1.bf16.msra.mxu0 %v660
        %669 = vmatprep.subr.bf16.mxu0 0
        %670 = vmatpush1.bf16.msra.mxu0 %v661
        %671 = vmatprep.subr.bf16.mxu0 0
        %672 = vmatpush1.bf16.msra.mxu0 0
        %673 = vmatprep.subr.bf16.mxu0 0
        %674 = vmatpush1.bf16.msra.mxu0 0
        %675 = vmatprep.subr.bf16.mxu0 0
        %676 = vmatpush1.bf16.msra.mxu0 0
        %677 = vmatprep.subr.bf16.mxu0 0
        %678 = vmatpush1.bf16.msra.mxu0 0
        %679 = vmatprep.subr.bf16.mxu0 0
        %680 = vmatpush1.bf16.msra.mxu0 0
        %681 = vmatprep.subr.bf16.mxu0 0
        %682 = vmatpush1.bf16.msra.mxu0 0
        %683 = vmatprep.subr.bf16.mxu0 0
        %684 = vmatpush1.bf16.msra.mxu0 0
        %685 = vmatprep.subr.bf16.mxu0 0
        %686 = vmatpush1.bf16.msra.mxu0 0
        %687 = vmatprep.subr.bf16.mxu0 0
        %688 = vmatpush1.bf16.msra.mxu0 0
        %689 = vmatprep.subr.bf16.mxu0 0
        %690 = vmatpush1.bf16.msra.mxu0 0
        %691 = vmatprep.subr.bf16.mxu0 0
        %692 = vmatpush1.bf16.msra.mxu0 0
        %693 = vmatprep.subr.bf16.mxu0 0
        %694 = vmatpush1.bf16.msra.mxu0 0
        %695 = vmatprep.subr.bf16.mxu0 0
        %696 = vmatpush1.bf16.msra.mxu0 0
        %697 = vmatprep.subr.bf16.mxu0 0
        %698 = vmatpush1.bf16.msra.mxu0 0
        %699 = vmatprep.mubr.bf16.mxu0 0
        %700 = vmatmul.mubr.bf16.gmra.mrb[0].mxu0 %v665
        %v701 = vpop.f32.mrb[0].mxu0
        %v702 = vadd.f32 %v650, %v701
        %v703 = vpop.f32.mrb[0].mxu0
        %v704 = vpop.f32.mrb[0].mxu0
        %v705 = vpop.f32.mrb[0].mxu0
        %706 = vdwg.mxu0
        %v707 = vpack.c.bf16 %v574, %v574
        %v708 = vpack.c.bf16 %v636, %v636
        %v709 = vpack.c.bf16 %v702, %v702
        %vm710 = vcmask 130048
        %v712 = vsel %vm710, %v707, 0
        %v715 = vsel %vm710, %v708, 0
        %717 = vmatprep.subr.bf16.mxu0 0
        %718 = vmatpush1.bf16.xpose.msra.mxu0 %v715
        %719 = vmatprep.subr.bf16.mxu0 0
        %720 = vmatpush1.bf16.xpose.msra.mxu0 0
        %721 = vmatprep.subr.bf16.mxu0 0
        %722 = vmatpush1.bf16.xpose.msra.mxu0 0
        %723 = vmatprep.subr.bf16.mxu0 0
        %724 = vmatpush1.bf16.xpose.msra.mxu0 0
        %725 = vmatprep.subr.bf16.mxu0 0
        %726 = vmatpush1.bf16.xpose.msra.mxu0 0
        %727 = vmatprep.subr.bf16.mxu0 0
        %728 = vmatpush1.bf16.xpose.msra.mxu0 0
        %729 = vmatprep.subr.bf16.mxu0 0
        %730 = vmatpush1.bf16.xpose.msra.mxu0 0
        %731 = vmatprep.subr.bf16.mxu0 0
        %732 = vmatpush1.bf16.xpose.msra.mxu0 0
        %733 = vmatprep.subr.bf16.mxu0 0
        %734 = vmatpush1.bf16.xpose.msra.mxu0 0
        %735 = vmatprep.subr.bf16.mxu0 0
        %736 = vmatpush1.bf16.xpose.msra.mxu0 0
        %737 = vmatprep.subr.bf16.mxu0 0
        %738 = vmatpush1.bf16.xpose.msra.mxu0 0
        %739 = vmatprep.subr.bf16.mxu0 0
        %740 = vmatpush1.bf16.xpose.msra.mxu0 0
        %741 = vmatprep.subr.bf16.mxu0 0
        %742 = vmatpush1.bf16.xpose.msra.mxu0 0
        %743 = vmatprep.subr.bf16.mxu0 0
        %744 = vmatpush1.bf16.xpose.msra.mxu0 0
        %745 = vmatprep.subr.bf16.mxu0 0
        %746 = vmatpush1.bf16.xpose.msra.mxu0 0
        %747 = vmatprep.subr.bf16.mxu0 0
        %748 = vmatpush1.bf16.xpose.msra.mxu0 0
        %749 = vmatprep.mubr.bf16.mxu0 0
        %750 = vmatmul.mubr.bf16.gmra.mrb[0].mxu0 %v712
        %v751 = vpop.f32.mrb[0].mxu0
        %v752 = vadd.f32 %v506, %v751
        %v753 = vpop.f32.mrb[0].mxu0
        %v754 = vpop.f32.mrb[0].mxu0
        %v755 = vpop.f32.mrb[0].mxu0
        %756 = vdwg.mxu0
        %vm757 = vcmask 64512
        %v758 = vsel %vm757, %v752, -inf
        %759 = vmax.xlane.f32.xlu0 %v758
        %v760 = vpop.xlane.xlu0 %759
        %v761 = vsub.f32 %v752, %v760
        %v762 = vmul.f32 %v761, 1.442695
        %v763 = vpow.pop %v762
        %v764 = vsel %vm757, %v763, 0.0
        %765 = vadd.xlane.f32.xlu0 %v764
        %v766 = vpop.xlane.xlu0 %765
        %v767 = vrcp.pop %v766
        %v768 = vmul.f32 %v763, %v767
        %769 = vst.msk [vmem:[%s481] sm:$0xff] %vm757, %v768
        %v770 = vpack.c.bf16 %v768, %v768
        %v772 = vsel %vm757, %v770, 0
        %vm774 = vcmask 1043456
        %v776 = vsel %vm774, %v709, 0
        %778 = vmatprep.subr.bf16.mxu0 0
        %779 = vmatpush1.bf16.msra.mxu0 %v776
        %780 = vmatprep.subr.bf16.mxu0 0
        %781 = vmatpush1.bf16.msra.mxu0 0
        %782 = vmatprep.subr.bf16.mxu0 0
        %783 = vmatpush1.bf16.msra.mxu0 0
        %784 = vmatprep.subr.bf16.mxu0 0
        %785 = vmatpush1.bf16.msra.mxu0 0
        %786 = vmatprep.subr.bf16.mxu0 0
        %787 = vmatpush1.bf16.msra.mxu0 0
        %788 = vmatprep.subr.bf16.mxu0 0
        %789 = vmatpush1.bf16.msra.mxu0 0
        %790 = vmatprep.subr.bf16.mxu0 0
        %791 = vmatpush1.bf16.msra.mxu0 0
        %792 = vmatprep.subr.bf16.mxu0 0
        %793 = vmatpush1.bf16.msra.mxu0 0
        %794 = vmatprep.subr.bf16.mxu0 0
        %795 = vmatpush1.bf16.msra.mxu0 0
        %796 = vmatprep.subr.bf16.mxu0 0
        %797 = vmatpush1.bf16.msra.mxu0 0
        %798 = vmatprep.subr.bf16.mxu0 0
        %799 = vmatpush1.bf16.msra.mxu0 0
        %800 = vmatprep.subr.bf16.mxu0 0
        %801 = vmatpush1.bf16.msra.mxu0 0
        %802 = vmatprep.subr.bf16.mxu0 0
        %803 = vmatpush1.bf16.msra.mxu0 0
        %804 = vmatprep.subr.bf16.mxu0 0
        %805 = vmatpush1.bf16.msra.mxu0 0
        %806 = vmatprep.subr.bf16.mxu0 0
        %807 = vmatpush1.bf16.msra.mxu0 0
        %808 = vmatprep.subr.bf16.mxu0 0
        %809 = vmatpush1.bf16.msra.mxu0 0
        %810 = vmatprep.mubr.bf16.mxu0 0
        %811 = vmatmul.mubr.bf16.gmra.mrb[0].mxu0 %v772
        %v812 = vpop.f32.mrb[0].mxu0
        %v813 = vadd.f32 0.0, %v812
        %v814 = vpop.f32.mrb[0].mxu0
        %v815 = vpop.f32.mrb[0].mxu0
        %v816 = vpop.f32.mrb[0].mxu0
        %817 = vdwg.mxu0
        %v818 = vpack.c.bf16 %v813, %v813
        %v819 = vld [vmem:[%s10] sm:$0xf]
        %v820 = vld [vmem:[%s10 + $0x4] sm:$0xf]
        %s821 = scalar_lea.vmem %s4, 16
        %v822 = vld [vmem:[%s821] sm:$0xf]
        %v823 = vld [vmem:[%s821 + $0x4] sm:$0xf]
        %v824 = vld [vmem:[%s821 + $0x8] sm:$0xf]
        %v825 = vld [vmem:[%s821 + $0xc] sm:$0xf]
        %s826 = scalar_lea.vmem %s5, 1
        %v827 = vld [vmem:[%s826] sm:$0x1]
        %v829 = vlaneseq
        %v830 = vshrl.u32 %v829, 7
        %v831 = vsub.s32 0, %v830
        %v832 = vrot.slane %v827, %v831
        %v838 = vunpack.c.l.b16 %v822
        %v839 = vunpack.c.l.b16 %v823
        %v840 = vunpack.c.l.b16 %v824
        %v841 = vunpack.c.l.b16 %v825
        %v842 = vpack.c.b16 %v839, %v838
        %v843 = vpack.c.b16 %v841, %v840
        %846 = vmatprep.subr.bf16.mxu0 0
        %847 = vmatpush1.bf16.msra.mxu0 %v842
        %848 = vmatprep.subr.bf16.mxu0 0
        %849 = vmatpush1.bf16.msra.mxu0 %v843
        %850 = vmatprep.subr.bf16.mxu0 0
        %851 = vmatpush1.bf16.msra.mxu0 0
        %852 = vmatprep.subr.bf16.mxu0 0
        %853 = vmatpush1.bf16.msra.mxu0 0
        %854 = vmatprep.subr.bf16.mxu0 0
        %855 = vmatpush1.bf16.msra.mxu0 0
        %856 = vmatprep.subr.bf16.mxu0 0
        %857 = vmatpush1.bf16.msra.mxu0 0
        %858 = vmatprep.subr.bf16.mxu0 0
        %859 = vmatpush1.bf16.msra.mxu0 0
        %860 = vmatprep.subr.bf16.mxu0 0
        %861 = vmatpush1.bf16.msra.mxu0 0
        %862 = vmatprep.subr.bf16.mxu0 0
        %863 = vmatpush1.bf16.msra.mxu0 0
        %864 = vmatprep.subr.bf16.mxu0 0
        %865 = vmatpush1.bf16.msra.mxu0 0
        %866 = vmatprep.subr.bf16.mxu0 0
        %867 = vmatpush1.bf16.msra.mxu0 0
        %868 = vmatprep.subr.bf16.mxu0 0
        %869 = vmatpush1.bf16.msra.mxu0 0
        %870 = vmatprep.subr.bf16.mxu0 0
        %871 = vmatpush1.bf16.msra.mxu0 0
        %872 = vmatprep.subr.bf16.mxu0 0
        %873 = vmatpush1.bf16.msra.mxu0 0
        %874 = vmatprep.subr.bf16.mxu0 0
        %875 = vmatpush1.bf16.msra.mxu0 0
        %876 = vmatprep.subr.bf16.mxu0 0
        %877 = vmatpush1.bf16.msra.mxu0 0
        %878 = vmatprep.mubr.bf16.mxu0 0
        %879 = vmatmul.mubr.bf16.gmra.mrb[0].mxu0 %v532
        %v880 = vpop.f32.mrb[0].mxu0
        %v881 = vadd.f32 %v832, %v880
        %v882 = vpop.f32.mrb[0].mxu0
        %v883 = vpop.f32.mrb[0].mxu0
        %v884 = vpop.f32.mrb[0].mxu0
        %885 = vdwg.mxu0
        %v886 = vmul.f32 %v881, 0.25
        %s887 = scalar_lea.vmem %s6, 16
        %v888 = vld [vmem:[%s887] sm:$0xf]
        %v889 = vld [vmem:[%s887 + $0x4] sm:$0xf]
        %v890 = vld [vmem:[%s887 + $0x8] sm:$0xf]
        %v891 = vld [vmem:[%s887 + $0xc] sm:$0xf]
        %s892 = scalar_lea.vmem %s7, 1
        %v893 = vld [vmem:[%s892] sm:$0x1]
        %v895 = vlaneseq
        %v896 = vshrl.u32 %v895, 7
        %v897 = vsub.s32 0, %v896
        %v898 = vrot.slane %v893, %v897
        %v904 = vunpack.c.l.b16 %v888
        %v905 = vunpack.c.l.b16 %v889
        %v906 = vunpack.c.l.b16 %v890
        %v907 = vunpack.c.l.b16 %v891
        %v908 = vpack.c.b16 %v905, %v904
        %v909 = vpack.c.b16 %v907, %v906
        %912 = vmatprep.subr.bf16.mxu0 0
        %913 = vmatpush1.bf16.msra.mxu0 %v908
        %914 = vmatprep.subr.bf16.mxu0 0
        %915 = vmatpush1.bf16.msra.mxu0 %v909
        %916 = vmatprep.subr.bf16.mxu0 0
        %917 = vmatpush1.bf16.msra.mxu0 0
        %918 = vmatprep.subr.bf16.mxu0 0
        %919 = vmatpush1.bf16.msra.mxu0 0
        %920 = vmatprep.subr.bf16.mxu0 0
        %921 = vmatpush1.bf16.msra.mxu0 0
        %922 = vmatprep.subr.bf16.mxu0 0
        %923 = vmatpush1.bf16.msra.mxu0 0
        %924 = vmatprep.subr.bf16.mxu0 0
        %925 = vmatpush1.bf16.msra.mxu0 0
        %926 = vmatprep.subr.bf16.mxu0 0
        %927 = vmatpush1.bf16.msra.mxu0 0
        %928 = vmatprep.subr.bf16.mxu0 0
        %929 = vmatpush1.bf16.msra.mxu0 0
        %930 = vmatprep.subr.bf16.mxu0 0
        %931 = vmatpush1.bf16.msra.mxu0 0
        %932 = vmatprep.subr.bf16.mxu0 0
        %933 = vmatpush1.bf16.msra.mxu0 0
        %934 = vmatprep.subr.bf16.mxu0 0
        %935 = vmatpush1.bf16.msra.mxu0 0
        %936 = vmatprep.subr.bf16.mxu0 0
        %937 = vmatpush1.bf16.msra.mxu0 0
        %938 = vmatprep.subr.bf16.mxu0 0
        %939 = vmatpush1.bf16.msra.mxu0 0
        %940 = vmatprep.subr.bf16.mxu0 0
        %941 = vmatpush1.bf16.msra.mxu0 0
        %942 = vmatprep.subr.bf16.mxu0 0
        %943 = vmatpush1.bf16.msra.mxu0 0
        %944 = vmatprep.mubr.bf16.mxu0 0
        %945 = vmatmul.mubr.bf16.gmra.mrb[0].mxu0 %v599
        %v946 = vpop.f32.mrb[0].mxu0
        %v947 = vadd.f32 %v898, %v946
        %v948 = vpop.f32.mrb[0].mxu0
        %v949 = vpop.f32.mrb[0].mxu0
        %v950 = vpop.f32.mrb[0].mxu0
        %951 = vdwg.mxu0
        %s952 = scalar_lea.vmem %s8, 16
        %v953 = vld [vmem:[%s952] sm:$0xf]
        %v954 = vld [vmem:[%s952 + $0x4] sm:$0xf]
        %v955 = vld [vmem:[%s952 + $0x8] sm:$0xf]
        %v956 = vld [vmem:[%s952 + $0xc] sm:$0xf]
        %s957 = scalar_lea.vmem %s9, 1
        %v958 = vld [vmem:[%s957] sm:$0x1]
        %v960 = vlaneseq
        %v961 = vshrl.u32 %v960, 7
        %v962 = vsub.s32 0, %v961
        %v963 = vrot.slane %v958, %v962
        %v969 = vunpack.c.l.b16 %v953
        %v970 = vunpack.c.l.b16 %v954
        %v971 = vunpack.c.l.b16 %v955
        %v972 = vunpack.c.l.b16 %v956
        %v973 = vpack.c.b16 %v970, %v969
        %v974 = vpack.c.b16 %v972, %v971
        %977 = vmatprep.subr.bf16.mxu0 0
        %978 = vmatpush1.bf16.msra.mxu0 %v973
        %979 = vmatprep.subr.bf16.mxu0 0
        %980 = vmatpush1.bf16.msra.mxu0 %v974
        %981 = vmatprep.subr.bf16.mxu0 0
        %982 = vmatpush1.bf16.msra.mxu0 0
        %983 = vmatprep.subr.bf16.mxu0 0
        %984 = vmatpush1.bf16.msra.mxu0 0
        %985 = vmatprep.subr.bf16.mxu0 0
        %986 = vmatpush1.bf16.msra.mxu0 0
        %987 = vmatprep.subr.bf16.mxu0 0
        %988 = vmatpush1.bf16.msra.mxu0 0
        %989 = vmatprep.subr.bf16.mxu0 0
        %990 = vmatpush1.bf16.msra.mxu0 0
        %991 = vmatprep.subr.bf16.mxu0 0
        %992 = vmatpush1.bf16.msra.mxu0 0
        %993 = vmatprep.subr.bf16.mxu0 0
        %994 = vmatpush1.bf16.msra.mxu0 0
        %995 = vmatprep.subr.bf16.mxu0 0
        %996 = vmatpush1.bf16.msra.mxu0 0
        %997 = vmatprep.subr.bf16.mxu0 0
        %998 = vmatpush1.bf16.msra.mxu0 0
        %999 = vmatprep.subr.bf16.mxu0 0
        %1000 = vmatpush1.bf16.msra.mxu0 0
        %1001 = vmatprep.subr.bf16.mxu0 0
        %1002 = vmatpush1.bf16.msra.mxu0 0
        %1003 = vmatprep.subr.bf16.mxu0 0
        %1004 = vmatpush1.bf16.msra.mxu0 0
        %1005 = vmatprep.subr.bf16.mxu0 0
        %1006 = vmatpush1.bf16.msra.mxu0 0
        %1007 = vmatprep.subr.bf16.mxu0 0
        %1008 = vmatpush1.bf16.msra.mxu0 0
        %1009 = vmatprep.mubr.bf16.mxu0 0
        %1010 = vmatmul.mubr.bf16.gmra.mrb[0].mxu0 %v665
        %v1011 = vpop.f32.mrb[0].mxu0
        %v1012 = vadd.f32 %v963, %v1011
        %v1013 = vpop.f32.mrb[0].mxu0
        %v1014 = vpop.f32.mrb[0].mxu0
        %v1015 = vpop.f32.mrb[0].mxu0
        %1016 = vdwg.mxu0
        %v1017 = vpack.c.bf16 %v886, %v886
        %v1018 = vpack.c.bf16 %v947, %v947
        %v1019 = vpack.c.bf16 %v1012, %v1012
        %v1021 = vsel %vm710, %v1017, 0
        %v1024 = vsel %vm710, %v1018, 0
        %1026 = vmatprep.subr.bf16.mxu0 0
        %1027 = vmatpush1.bf16.xpose.msra.mxu0 %v1024
        %1028 = vmatprep.subr.bf16.mxu0 0
        %1029 = vmatpush1.bf16.xpose.msra.mxu0 0
        %1030 = vmatprep.subr.bf16.mxu0 0
        %1031 = vmatpush1.bf16.xpose.msra.mxu0 0
        %1032 = vmatprep.subr.bf16.mxu0 0
        %1033 = vmatpush1.bf16.xpose.msra.mxu0 0
        %1034 = vmatprep.subr.bf16.mxu0 0
        %1035 = vmatpush1.bf16.xpose.msra.mxu0 0
        %1036 = vmatprep.subr.bf16.mxu0 0
        %1037 = vmatpush1.bf16.xpose.msra.mxu0 0
        %1038 = vmatprep.subr.bf16.mxu0 0
        %1039 = vmatpush1.bf16.xpose.msra.mxu0 0
        %1040 = vmatprep.subr.bf16.mxu0 0
        %1041 = vmatpush1.bf16.xpose.msra.mxu0 0
        %1042 = vmatprep.subr.bf16.mxu0 0
        %1043 = vmatpush1.bf16.xpose.msra.mxu0 0
        %1044 = vmatprep.subr.bf16.mxu0 0
        %1045 = vmatpush1.bf16.xpose.msra.mxu0 0
        %1046 = vmatprep.subr.bf16.mxu0 0
        %1047 = vmatpush1.bf16.xpose.msra.mxu0 0
        %1048 = vmatprep.subr.bf16.mxu0 0
        %1049 = vmatpush1.bf16.xpose.msra.mxu0 0
        %1050 = vmatprep.subr.bf16.mxu0 0
        %1051 = vmatpush1.bf16.xpose.msra.mxu0 0
        %1052 = vmatprep.subr.bf16.mxu0 0
        %1053 = vmatpush1.bf16.xpose.msra.mxu0 0
        %1054 = vmatprep.subr.bf16.mxu0 0
        %1055 = vmatpush1.bf16.xpose.msra.mxu0 0
        %1056 = vmatprep.subr.bf16.mxu0 0
        %1057 = vmatpush1.bf16.xpose.msra.mxu0 0
        %1058 = vmatprep.mubr.bf16.mxu0 0
        %1059 = vmatmul.mubr.bf16.gmra.mrb[0].mxu0 %v1021
        %v1060 = vpop.f32.mrb[0].mxu0
        %v1061 = vadd.f32 %v506, %v1060
        %v1062 = vpop.f32.mrb[0].mxu0
        %v1063 = vpop.f32.mrb[0].mxu0
        %v1064 = vpop.f32.mrb[0].mxu0
        %1065 = vdwg.mxu0
        %v1066 = vsel %vm757, %v1061, -inf
        %1067 = vmax.xlane.f32.xlu0 %v1066
        %v1068 = vpop.xlane.xlu0 %1067
        %v1069 = vsub.f32 %v1061, %v1068
        %v1070 = vmul.f32 %v1069, 1.442695
        %v1071 = vpow.pop %v1070
        %v1072 = vsel %vm757, %v1071, 0.0
        %1073 = vadd.xlane.f32.xlu0 %v1072
        %v1074 = vpop.xlane.xlu0 %1073
        %v1075 = vrcp.pop %v1074
        %v1076 = vmul.f32 %v1071, %v1075
        %s1077 = scalar_lea.vmem %s481, 8 [#allocation4]
        %1078 = vst.msk [vmem:[%s1077] sm:$0xff] %vm757, %v1076
        %v1079 = vpack.c.bf16 %v1076, %v1076
        %v1081 = vsel %vm757, %v1079, 0
        %v1084 = vsel %vm774, %v1019, 0
        %1086 = vmatprep.subr.bf16.mxu0 0
        %1087 = vmatpush1.bf16.msra.mxu0 %v1084
        %1088 = vmatprep.subr.bf16.mxu0 0
        %1089 = vmatpush1.bf16.msra.mxu0 0
        %1090 = vmatprep.subr.bf16.mxu0 0
        %1091 = vmatpush1.bf16.msra.mxu0 0
        %1092 = vmatprep.subr.bf16.mxu0 0
        %1093 = vmatpush1.bf16.msra.mxu0 0
        %1094 = vmatprep.subr.bf16.mxu0 0
        %1095 = vmatpush1.bf16.msra.mxu0 0
        %1096 = vmatprep.subr.bf16.mxu0 0
        %1097 = vmatpush1.bf16.msra.mxu0 0
        %1098 = vmatprep.subr.bf16.mxu0 0
        %1099 = vmatpush1.bf16.msra.mxu0 0
        %1100 = vmatprep.subr.bf16.mxu0 0
        %1101 = vmatpush1.bf16.msra.mxu0 0
        %1102 = vmatprep.subr.bf16.mxu0 0
        %1103 = vmatpush1.bf16.msra.mxu0 0
        %1104 = vmatprep.subr.bf16.mxu0 0
        %1105 = vmatpush1.bf16.msra.mxu0 0
        %1106 = vmatprep.subr.bf16.mxu0 0
        %1107 = vmatpush1.bf16.msra.mxu0 0
        %1108 = vmatprep.subr.bf16.mxu0 0
        %1109 = vmatpush1.bf16.msra.mxu0 0
        %1110 = vmatprep.subr.bf16.mxu0 0
        %1111 = vmatpush1.bf16.msra.mxu0 0
        %1112 = vmatprep.subr.bf16.mxu0 0
        %1113 = vmatpush1.bf16.msra.mxu0 0
        %1114 = vmatprep.subr.bf16.mxu0 0
        %1115 = vmatpush1.bf16.msra.mxu0 0
        %1116 = vmatprep.subr.bf16.mxu0 0
        %1117 = vmatpush1.bf16.msra.mxu0 0
        %1118 = vmatprep.mubr.bf16.mxu0 0
        %1119 = vmatmul.mubr.bf16.gmra.mrb[0].mxu0 %v1081
        %v1120 = vpop.f32.mrb[0].mxu0
        %v1121 = vadd.f32 0.0, %v1120
        %v1122 = vpop.f32.mrb[0].mxu0
        %v1123 = vpop.f32.mrb[0].mxu0
        %v1124 = vpop.f32.mrb[0].mxu0
        %1125 = vdwg.mxu0
        %v1126 = vpack.c.bf16 %v1121, %v1121
        %s1127 = scalar_lea.vmem %s10, 8
        %v1128 = vld [vmem:[%s1127] sm:$0xf]
        %v1129 = vld [vmem:[%s1127 + $0x4] sm:$0xf]
        %v1132 = vunpack.c.l.b16 %v1128
        %v1133 = vunpack.c.l.b16 %v1129
        %v1134 = vpack.c.b16 %v1133, %v1132
        %v1137 = vsel %vm710, %v1126, 0
        %1139 = vmatprep.subr.bf16.mxu0 0
        %1140 = vmatpush1.bf16.msra.mxu0 %v1134
        %1141 = vmatprep.subr.bf16.mxu0 0
        %1142 = vmatpush1.bf16.msra.mxu0 0
        %1143 = vmatprep.subr.bf16.mxu0 0
        %1144 = vmatpush1.bf16.msra.mxu0 0
        %1145 = vmatprep.subr.bf16.mxu0 0
        %1146 = vmatpush1.bf16.msra.mxu0 0
        %1147 = vmatprep.subr.bf16.mxu0 0
        %1148 = vmatpush1.bf16.msra.mxu0 0
        %1149 = vmatprep.subr.bf16.mxu0 0
        %1150 = vmatpush1.bf16.msra.mxu0 0
        %1151 = vmatprep.subr.bf16.mxu0 0
        %1152 = vmatpush1.bf16.msra.mxu0 0
        %1153 = vmatprep.subr.bf16.mxu0 0
        %1154 = vmatpush1.bf16.msra.mxu0 0
        %1155 = vmatprep.subr.bf16.mxu0 0
        %1156 = vmatpush1.bf16.msra.mxu0 0
        %1157 = vmatprep.subr.bf16.mxu0 0
        %1158 = vmatpush1.bf16.msra.mxu0 0
        %1159 = vmatprep.subr.bf16.mxu0 0
        %1160 = vmatpush1.bf16.msra.mxu0 0
        %1161 = vmatprep.subr.bf16.mxu0 0
        %1162 = vmatpush1.bf16.msra.mxu0 0
        %1163 = vmatprep.subr.bf16.mxu0 0
        %1164 = vmatpush1.bf16.msra.mxu0 0
        %1165 = vmatprep.subr.bf16.mxu0 0
        %1166 = vmatpush1.bf16.msra.mxu0 0
        %1167 = vmatprep.subr.bf16.mxu0 0
        %1168 = vmatpush1.bf16.msra.mxu0 0
        %1169 = vmatprep.subr.bf16.mxu0 0
        %1170 = vmatpush1.bf16.msra.mxu0 0
        %1171 = vmatprep.mubr.bf16.mxu0 0
        %1172 = vmatmul.mubr.bf16.gmra.mrb[0].mxu0 %v1137
        %v1173 = vpop.f32.mrb[0].mxu0
        %v1174 = vadd.f32 0.0, %v1173
        %v1175 = vpop.f32.mrb[0].mxu0
        %v1176 = vpop.f32.mrb[0].mxu0
        %v1177 = vpop.f32.mrb[0].mxu0
        %1178 = vdwg.mxu0
        %v1181 = vunpack.c.l.b16 %v819
        %v1182 = vunpack.c.l.b16 %v820
        %v1183 = vpack.c.b16 %v1182, %v1181
        %v1186 = vsel %vm710, %v818, 0
        %1188 = vmatprep.subr.bf16.mxu0 0
        %1189 = vmatpush1.bf16.msra.mxu0 %v1183
        %1190 = vmatprep.subr.bf16.mxu0 0
        %1191 = vmatpush1.bf16.msra.mxu0 0
        %1192 = vmatprep.subr.bf16.mxu0 0
        %1193 = vmatpush1.bf16.msra.mxu0 0
        %1194 = vmatprep.subr.bf16.mxu0 0
        %1195 = vmatpush1.bf16.msra.mxu0 0
        %1196 = vmatprep.subr.bf16.mxu0 0
        %1197 = vmatpush1.bf16.msra.mxu0 0
        %1198 = vmatprep.subr.bf16.mxu0 0
        %1199 = vmatpush1.bf16.msra.mxu0 0
        %1200 = vmatprep.subr.bf16.mxu0 0
        %1201 = vmatpush1.bf16.msra.mxu0 0
        %1202 = vmatprep.subr.bf16.mxu0 0
        %1203 = vmatpush1.bf16.msra.mxu0 0
        %1204 = vmatprep.subr.bf16.mxu0 0
        %1205 = vmatpush1.bf16.msra.mxu0 0
        %1206 = vmatprep.subr.bf16.mxu0 0
        %1207 = vmatpush1.bf16.msra.mxu0 0
        %1208 = vmatprep.subr.bf16.mxu0 0
        %1209 = vmatpush1.bf16.msra.mxu0 0
        %1210 = vmatprep.subr.bf16.mxu0 0
        %1211 = vmatpush1.bf16.msra.mxu0 0
        %1212 = vmatprep.subr.bf16.mxu0 0
        %1213 = vmatpush1.bf16.msra.mxu0 0
        %1214 = vmatprep.subr.bf16.mxu0 0
        %1215 = vmatpush1.bf16.msra.mxu0 0
        %1216 = vmatprep.subr.bf16.mxu0 0
        %1217 = vmatpush1.bf16.msra.mxu0 0
        %1218 = vmatprep.subr.bf16.mxu0 0
        %1219 = vmatpush1.bf16.msra.mxu0 0
        %1220 = vmatprep.mubr.bf16.mxu0 0
        %1221 = vmatmul.mubr.bf16.gmra.mrb[0].mxu0 %v1186
        %v1222 = vpop.f32.mrb[0].mxu0
        %v1223 = vadd.f32 %v1174, %v1222
        %v1224 = vpop.f32.mrb[0].mxu0
        %v1225 = vpop.f32.mrb[0].mxu0
        %v1226 = vpop.f32.mrb[0].mxu0
        %1227 = vdwg.mxu0
        %s1228 = scalar_lea.vmem %s4, 32
        %v1229 = vld [vmem:[%s1228] sm:$0xf]
        %v1230 = vld [vmem:[%s1228 + $0x4] sm:$0xf]
        %v1231 = vld [vmem:[%s1228 + $0x8] sm:$0xf]
        %v1232 = vld [vmem:[%s1228 + $0xc] sm:$0xf]
        %s1233 = scalar_lea.vmem %s5, 2
        %v1234 = vld [vmem:[%s1233] sm:$0x1]
        %v1236 = vlaneseq
        %v1237 = vshrl.u32 %v1236, 7
        %v1238 = vsub.s32 0, %v1237
        %v1239 = vrot.slane %v1234, %v1238
        %v1245 = vunpack.c.l.b16 %v1229
        %v1246 = vunpack.c.l.b16 %v1230
        %v1247 = vunpack.c.l.b16 %v1231
        %v1248 = vunpack.c.l.b16 %v1232
        %v1249 = vpack.c.b16 %v1246, %v1245
        %v1250 = vpack.c.b16 %v1248, %v1247
        %1253 = vmatprep.subr.bf16.mxu0 0
        %1254 = vmatpush1.bf16.msra.mxu0 %v1249
        %1255 = vmatprep.subr.bf16.mxu0 0
        %1256 = vmatpush1.bf16.msra.mxu0 %v1250
        %1257 = vmatprep.subr.bf16.mxu0 0
        %1258 = vmatpush1.bf16.msra.mxu0 0
        %1259 = vmatprep.subr.bf16.mxu0 0
        %1260 = vmatpush1.bf16.msra.mxu0 0
        %1261 = vmatprep.subr.bf16.mxu0 0
        %1262 = vmatpush1.bf16.msra.mxu0 0
        %1263 = vmatprep.subr.bf16.mxu0 0
        %1264 = vmatpush1.bf16.msra.mxu0 0
        %1265 = vmatprep.subr.bf16.mxu0 0
        %1266 = vmatpush1.bf16.msra.mxu0 0
        %1267 = vmatprep.subr.bf16.mxu0 0
        %1268 = vmatpush1.bf16.msra.mxu0 0
        %1269 = vmatprep.subr.bf16.mxu0 0
        %1270 = vmatpush1.bf16.msra.mxu0 0
        %1271 = vmatprep.subr.bf16.mxu0 0
        %1272 = vmatpush1.bf16.msra.mxu0 0
        %1273 = vmatprep.subr.bf16.mxu0 0
        %1274 = vmatpush1.bf16.msra.mxu0 0
        %1275 = vmatprep.subr.bf16.mxu0 0
        %1276 = vmatpush1.bf16.msra.mxu0 0
        %1277 = vmatprep.subr.bf16.mxu0 0
        %1278 = vmatpush1.bf16.msra.mxu0 0
        %1279 = vmatprep.subr.bf16.mxu0 0
        %1280 = vmatpush1.bf16.msra.mxu0 0
        %1281 = vmatprep.subr.bf16.mxu0 0
        %1282 = vmatpush1.bf16.msra.mxu0 0
        %1283 = vmatprep.subr.bf16.mxu0 0
        %1284 = vmatpush1.bf16.msra.mxu0 0
        %1285 = vmatprep.mubr.bf16.mxu0 0
        %1286 = vmatmul.mubr.bf16.gmra.mrb[0].mxu0 %v532
        %v1287 = vpop.f32.mrb[0].mxu0
        %v1288 = vadd.f32 %v1239, %v1287
        %v1289 = vpop.f32.mrb[0].mxu0
        %v1290 = vpop.f32.mrb[0].mxu0
        %v1291 = vpop.f32.mrb[0].mxu0
        %1292 = vdwg.mxu0
        %v1293 = vmul.f32 %v1288, 0.25
        %s1294 = scalar_lea.vmem %s6, 32
        %v1295 = vld [vmem:[%s1294] sm:$0xf]
        %v1296 = vld [vmem:[%s1294 + $0x4] sm:$0xf]
        %v1297 = vld [vmem:[%s1294 + $0x8] sm:$0xf]
        %v1298 = vld [vmem:[%s1294 + $0xc] sm:$0xf]
        %s1299 = scalar_lea.vmem %s7, 2
        %v1300 = vld [vmem:[%s1299] sm:$0x1]
        %v1302 = vlaneseq
        %v1303 = vshrl.u32 %v1302, 7
        %v1304 = vsub.s32 0, %v1303
        %v1305 = vrot.slane %v1300, %v1304
        %v1311 = vunpack.c.l.b16 %v1295
        %v1312 = vunpack.c.l.b16 %v1296
        %v1313 = vunpack.c.l.b16 %v1297
        %v1314 = vunpack.c.l.b16 %v1298
        %v1315 = vpack.c.b16 %v1312, %v1311
        %v1316 = vpack.c.b16 %v1314, %v1313
        %1319 = vmatprep.subr.bf16.mxu0 0
        %1320 = vmatpush1.bf16.msra.mxu0 %v1315
        %1321 = vmatprep.subr.bf16.mxu0 0
        %1322 = vmatpush1.bf16.msra.mxu0 %v1316
        %1323 = vmatprep.subr.bf16.mxu0 0
        %1324 = vmatpush1.bf16.msra.mxu0 0
        %1325 = vmatprep.subr.bf16.mxu0 0
        %1326 = vmatpush1.bf16.msra.mxu0 0
        %1327 = vmatprep.subr.bf16.mxu0 0
        %1328 = vmatpush1.bf16.msra.mxu0 0
        %1329 = vmatprep.subr.bf16.mxu0 0
        %1330 = vmatpush1.bf16.msra.mxu0 0
        %1331 = vmatprep.subr.bf16.mxu0 0
        %1332 = vmatpush1.bf16.msra.mxu0 0
        %1333 = vmatprep.subr.bf16.mxu0 0
        %1334 = vmatpush1.bf16.msra.mxu0 0
        %1335 = vmatprep.subr.bf16.mxu0 0
        %1336 = vmatpush1.bf16.msra.mxu0 0
        %1337 = vmatprep.subr.bf16.mxu0 0
        %1338 = vmatpush1.bf16.msra.mxu0 0
        %1339 = vmatprep.subr.bf16.mxu0 0
        %1340 = vmatpush1.bf16.msra.mxu0 0
        %1341 = vmatprep.subr.bf16.mxu0 0
        %1342 = vmatpush1.bf16.msra.mxu0 0
        %1343 = vmatprep.subr.bf16.mxu0 0
        %1344 = vmatpush1.bf16.msra.mxu0 0
        %1345 = vmatprep.subr.bf16.mxu0 0
        %1346 = vmatpush1.bf16.msra.mxu0 0
        %1347 = vmatprep.subr.bf16.mxu0 0
        %1348 = vmatpush1.bf16.msra.mxu0 0
        %1349 = vmatprep.subr.bf16.mxu0 0
        %1350 = vmatpush1.bf16.msra.mxu0 0
        %1351 = vmatprep.mubr.bf16.mxu0 0
        %1352 = vmatmul.mubr.bf16.gmra.mrb[0].mxu0 %v599
        %v1353 = vpop.f32.mrb[0].mxu0
        %v1354 = vadd.f32 %v1305, %v1353
        %v1355 = vpop.f32.mrb[0].mxu0
        %v1356 = vpop.f32.mrb[0].mxu0
        %v1357 = vpop.f32.mrb[0].mxu0
        %1358 = vdwg.mxu0
        %s1359 = scalar_lea.vmem %s8, 32
        %v1360 = vld [vmem:[%s1359] sm:$0xf]
        %v1361 = vld [vmem:[%s1359 + $0x4] sm:$0xf]
        %v1362 = vld [vmem:[%s1359 + $0x8] sm:$0xf]
        %v1363 = vld [vmem:[%s1359 + $0xc] sm:$0xf]
        %s1364 = scalar_lea.vmem %s9, 2
        %v1365 = vld [vmem:[%s1364] sm:$0x1]
        %v1367 = vlaneseq
        %v1368 = vshrl.u32 %v1367, 7
        %v1369 = vsub.s32 0, %v1368
        %v1370 = vrot.slane %v1365, %v1369
        %v1376 = vunpack.c.l.b16 %v1360
        %v1377 = vunpack.c.l.b16 %v1361
        %v1378 = vunpack.c.l.b16 %v1362
        %v1379 = vunpack.c.l.b16 %v1363
        %v1380 = vpack.c.b16 %v1377, %v1376
        %v1381 = vpack.c.b16 %v1379, %v1378
        %1384 = vmatprep.subr.bf16.mxu0 0
        %1385 = vmatpush1.bf16.msra.mxu0 %v1380
        %1386 = vmatprep.subr.bf16.mxu0 0
        %1387 = vmatpush1.bf16.msra.mxu0 %v1381
        %1388 = vmatprep.subr.bf16.mxu0 0
        %1389 = vmatpush1.bf16.msra.mxu0 0
        %1390 = vmatprep.subr.bf16.mxu0 0
        %1391 = vmatpush1.bf16.msra.mxu0 0
        %1392 = vmatprep.subr.bf16.mxu0 0
        %1393 = vmatpush1.bf16.msra.mxu0 0
        %1394 = vmatprep.subr.bf16.mxu0 0
        %1395 = vmatpush1.bf16.msra.mxu0 0
        %1396 = vmatprep.subr.bf16.mxu0 0
        %1397 = vmatpush1.bf16.msra.mxu0 0
        %1398 = vmatprep.subr.bf16.mxu0 0
        %1399 = vmatpush1.bf16.msra.mxu0 0
        %1400 = vmatprep.subr.bf16.mxu0 0
        %1401 = vmatpush1.bf16.msra.mxu0 0
        %1402 = vmatprep.subr.bf16.mxu0 0
        %1403 = vmatpush1.bf16.msra.mxu0 0
        %1404 = vmatprep.subr.bf16.mxu0 0
        %1405 = vmatpush1.bf16.msra.mxu0 0
        %1406 = vmatprep.subr.bf16.mxu0 0
        %1407 = vmatpush1.bf16.msra.mxu0 0
        %1408 = vmatprep.subr.bf16.mxu0 0
        %1409 = vmatpush1.bf16.msra.mxu0 0
        %1410 = vmatprep.subr.bf16.mxu0 0
        %1411 = vmatpush1.bf16.msra.mxu0 0
        %1412 = vmatprep.subr.bf16.mxu0 0
        %1413 = vmatpush1.bf16.msra.mxu0 0
        %1414 = vmatprep.subr.bf16.mxu0 0
        %1415 = vmatpush1.bf16.msra.mxu0 0
        %1416 = vmatprep.mubr.bf16.mxu0 0
        %1417 = vmatmul.mubr.bf16.gmra.mrb[0].mxu0 %v665
        %v1418 = vpop.f32.mrb[0].mxu0
        %v1419 = vadd.f32 %v1370, %v1418
        %v1420 = vpop.f32.mrb[0].mxu0
        %v1421 = vpop.f32.mrb[0].mxu0
        %v1422 = vpop.f32.mrb[0].mxu0
        %1423 = vdwg.mxu0
        %v1424 = vpack.c.bf16 %v1293, %v1293
        %v1425 = vpack.c.bf16 %v1354, %v1354
        %v1426 = vpack.c.bf16 %v1419, %v1419
        %v1428 = vsel %vm710, %v1424, 0
        %v1431 = vsel %vm710, %v1425, 0
        %1433 = vmatprep.subr.bf16.mxu0 0
        %1434 = vmatpush1.bf16.xpose.msra.mxu0 %v1431
        %1435 = vmatprep.subr.bf16.mxu0 0
        %1436 = vmatpush1.bf16.xpose.msra.mxu0 0
        %1437 = vmatprep.subr.bf16.mxu0 0
        %1438 = vmatpush1.bf16.xpose.msra.mxu0 0
        %1439 = vmatprep.subr.bf16.mxu0 0
        %1440 = vmatpush1.bf16.xpose.msra.mxu0 0
        %1441 = vmatprep.subr.bf16.mxu0 0
        %1442 = vmatpush1.bf16.xpose.msra.mxu0 0
        %1443 = vmatprep.subr.bf16.mxu0 0
        %1444 = vmatpush1.bf16.xpose.msra.mxu0 0
        %1445 = vmatprep.subr.bf16.mxu0 0
        %1446 = vmatpush1.bf16.xpose.msra.mxu0 0
        %1447 = vmatprep.subr.bf16.mxu0 0
        %1448 = vmatpush1.bf16.xpose.msra.mxu0 0
        %1449 = vmatprep.subr.bf16.mxu0 0
        %1450 = vmatpush1.bf16.xpose.msra.mxu0 0
        %1451 = vmatprep.subr.bf16.mxu0 0
        %1452 = vmatpush1.bf16.xpose.msra.mxu0 0
        %1453 = vmatprep.subr.bf16.mxu0 0
        %1454 = vmatpush1.bf16.xpose.msra.mxu0 0
        %1455 = vmatprep.subr.bf16.mxu0 0
        %1456 = vmatpush1.bf16.xpose.msra.mxu0 0
        %1457 = vmatprep.subr.bf16.mxu0 0
        %1458 = vmatpush1.bf16.xpose.msra.mxu0 0
        %1459 = vmatprep.subr.bf16.mxu0 0
        %1460 = vmatpush1.bf16.xpose.msra.mxu0 0
        %1461 = vmatprep.subr.bf16.mxu0 0
        %1462 = vmatpush1.bf16.xpose.msra.mxu0 0
        %1463 = vmatprep.subr.bf16.mxu0 0
        %1464 = vmatpush1.bf16.xpose.msra.mxu0 0
        %1465 = vmatprep.mubr.bf16.mxu0 0
        %1466 = vmatmul.mubr.bf16.gmra.mrb[0].mxu0 %v1428
        %v1467 = vpop.f32.mrb[0].mxu0
        %v1468 = vadd.f32 %v506, %v1467
        %v1469 = vpop.f32.mrb[0].mxu0
        %v1470 = vpop.f32.mrb[0].mxu0
        %v1471 = vpop.f32.mrb[0].mxu0
        %1472 = vdwg.mxu0
        %v1473 = vsel %vm757, %v1468, -inf
        %1474 = vmax.xlane.f32.xlu0 %v1473
        %v1475 = vpop.xlane.xlu0 %1474
        %v1476 = vsub.f32 %v1468, %v1475
        %v1477 = vmul.f32 %v1476, 1.442695
        %v1478 = vpow.pop %v1477
        %v1479 = vsel %vm757, %v1478, 0.0
        %1480 = vadd.xlane.f32.xlu0 %v1479
        %v1481 = vpop.xlane.xlu0 %1480
        %v1482 = vrcp.pop %v1481
        %v1483 = vmul.f32 %v1478, %v1482
        %s1484 = scalar_lea.vmem %s481, 16 [#allocation4]
        %1485 = vst.msk [vmem:[%s1484] sm:$0xff] %vm757, %v1483
        %v1486 = vpack.c.bf16 %v1483, %v1483
        %v1488 = vsel %vm757, %v1486, 0
        %v1491 = vsel %vm774, %v1426, 0
        %1493 = vmatprep.subr.bf16.mxu0 0
        %1494 = vmatpush1.bf16.msra.mxu0 %v1491
        %1495 = vmatprep.subr.bf16.mxu0 0
        %1496 = vmatpush1.bf16.msra.mxu0 0
        %1497 = vmatprep.subr.bf16.mxu0 0
        %1498 = vmatpush1.bf16.msra.mxu0 0
        %1499 = vmatprep.subr.bf16.mxu0 0
        %1500 = vmatpush1.bf16.msra.mxu0 0
        %1501 = vmatprep.subr.bf16.mxu0 0
        %1502 = vmatpush1.bf16.msra.mxu0 0
        %1503 = vmatprep.subr.bf16.mxu0 0
        %1504 = vmatpush1.bf16.msra.mxu0 0
        %1505 = vmatprep.subr.bf16.mxu0 0
        %1506 = vmatpush1.bf16.msra.mxu0 0
        %1507 = vmatprep.subr.bf16.mxu0 0
        %1508 = vmatpush1.bf16.msra.mxu0 0
        %1509 = vmatprep.subr.bf16.mxu0 0
        %1510 = vmatpush1.bf16.msra.mxu0 0
        %1511 = vmatprep.subr.bf16.mxu0 0
        %1512 = vmatpush1.bf16.msra.mxu0 0
        %1513 = vmatprep.subr.bf16.mxu0 0
        %1514 = vmatpush1.bf16.msra.mxu0 0
        %1515 = vmatprep.subr.bf16.mxu0 0
        %1516 = vmatpush1.bf16.msra.mxu0 0
        %1517 = vmatprep.subr.bf16.mxu0 0
        %1518 = vmatpush1.bf16.msra.mxu0 0
        %1519 = vmatprep.subr.bf16.mxu0 0
        %1520 = vmatpush1.bf16.msra.mxu0 0
        %1521 = vmatprep.subr.bf16.mxu0 0
        %1522 = vmatpush1.bf16.msra.mxu0 0
        %1523 = vmatprep.subr.bf16.mxu0 0
        %1524 = vmatpush1.bf16.msra.mxu0 0
        %1525 = vmatprep.mubr.bf16.mxu0 0
        %1526 = vmatmul.mubr.bf16.gmra.mrb[0].mxu0 %v1488
        %v1527 = vpop.f32.mrb[0].mxu0
        %v1528 = vadd.f32 0.0, %v1527
        %v1529 = vpop.f32.mrb[0].mxu0
        %v1530 = vpop.f32.mrb[0].mxu0
        %v1531 = vpop.f32.mrb[0].mxu0
        %1532 = vdwg.mxu0
        %v1533 = vpack.c.bf16 %v1528, %v1528
        %s1534 = scalar_lea.vmem %s10, 16
        %v1535 = vld [vmem:[%s1534] sm:$0xf]
        %v1536 = vld [vmem:[%s1534 + $0x4] sm:$0xf]
        %v1539 = vunpack.c.l.b16 %v1535
        %v1540 = vunpack.c.l.b16 %v1536
        %v1541 = vpack.c.b16 %v1540, %v1539
        %v1544 = vsel %vm710, %v1533, 0
        %1546 = vmatprep.subr.bf16.mxu0 0
        %1547 = vmatpush1.bf16.msra.mxu0 %v1541
        %1548 = vmatprep.subr.bf16.mxu0 0
        %1549 = vmatpush1.bf16.msra.mxu0 0
        %1550 = vmatprep.subr.bf16.mxu0 0
        %1551 = vmatpush1.bf16.msra.mxu0 0
        %1552 = vmatprep.subr.bf16.mxu0 0
        %1553 = vmatpush1.bf16.msra.mxu0 0
        %1554 = vmatprep.subr.bf16.mxu0 0
        %1555 = vmatpush1.bf16.msra.mxu0 0
        %1556 = vmatprep.subr.bf16.mxu0 0
        %1557 = vmatpush1.bf16.msra.mxu0 0
        %1558 = vmatprep.subr.bf16.mxu0 0
        %1559 = vmatpush1.bf16.msra.mxu0 0
        %1560 = vmatprep.subr.bf16.mxu0 0
        %1561 = vmatpush1.bf16.msra.mxu0 0
        %1562 = vmatprep.subr.bf16.mxu0 0
        %1563 = vmatpush1.bf16.msra.mxu0 0
        %1564 = vmatprep.subr.bf16.mxu0 0
        %1565 = vmatpush1.bf16.msra.mxu0 0
        %1566 = vmatprep.subr.bf16.mxu0 0
        %1567 = vmatpush1.bf16.msra.mxu0 0
        %1568 = vmatprep.subr.bf16.mxu0 0
        %1569 = vmatpush1.bf16.msra.mxu0 0
        %1570 = vmatprep.subr.bf16.mxu0 0
        %1571 = vmatpush1.bf16.msra.mxu0 0
        %1572 = vmatprep.subr.bf16.mxu0 0
        %1573 = vmatpush1.bf16.msra.mxu0 0
        %1574 = vmatprep.subr.bf16.mxu0 0
        %1575 = vmatpush1.bf16.msra.mxu0 0
        %1576 = vmatprep.subr.bf16.mxu0 0
        %1577 = vmatpush1.bf16.msra.mxu0 0
        %1578 = vmatprep.mubr.bf16.mxu0 0
        %1579 = vmatmul.mubr.bf16.gmra.mrb[0].mxu0 %v1544
        %v1580 = vpop.f32.mrb[0].mxu0
        %v1581 = vadd.f32 0.0, %v1580
        %v1582 = vpop.f32.mrb[0].mxu0
        %v1583 = vpop.f32.mrb[0].mxu0
        %v1584 = vpop.f32.mrb[0].mxu0
        %1585 = vdwg.mxu0
        %v1586 = vadd.f32 %v1223, %v1581
        %s1587 = scalar_lea.vmem %s4, 48
        %v1588 = vld [vmem:[%s1587] sm:$0xf]
        %v1589 = vld [vmem:[%s1587 + $0x4] sm:$0xf]
        %v1590 = vld [vmem:[%s1587 + $0x8] sm:$0xf]
        %v1591 = vld [vmem:[%s1587 + $0xc] sm:$0xf]
        %s1592 = scalar_lea.vmem %s5, 3
        %v1593 = vld [vmem:[%s1592] sm:$0x1]
        %v1595 = vlaneseq
        %v1596 = vshrl.u32 %v1595, 7
        %v1597 = vsub.s32 0, %v1596
        %v1598 = vrot.slane %v1593, %v1597
        %v1604 = vunpack.c.l.b16 %v1588
        %v1605 = vunpack.c.l.b16 %v1589
        %v1606 = vunpack.c.l.b16 %v1590
        %v1607 = vunpack.c.l.b16 %v1591
        %v1608 = vpack.c.b16 %v1605, %v1604
        %v1609 = vpack.c.b16 %v1607, %v1606
        %1612 = vmatprep.subr.bf16.mxu0 0
        %1613 = vmatpush1.bf16.msra.mxu0 %v1608
        %1614 = vmatprep.subr.bf16.mxu0 0
        %1615 = vmatpush1.bf16.msra.mxu0 %v1609
        %1616 = vmatprep.subr.bf16.mxu0 0
        %1617 = vmatpush1.bf16.msra.mxu0 0
        %1618 = vmatprep.subr.bf16.mxu0 0
        %1619 = vmatpush1.bf16.msra.mxu0 0
        %1620 = vmatprep.subr.bf16.mxu0 0
        %1621 = vmatpush1.bf16.msra.mxu0 0
        %1622 = vmatprep.subr.bf16.mxu0 0
        %1623 = vmatpush1.bf16.msra.mxu0 0
        %1624 = vmatprep.subr.bf16.mxu0 0
        %1625 = vmatpush1.bf16.msra.mxu0 0
        %1626 = vmatprep.subr.bf16.mxu0 0
        %1627 = vmatpush1.bf16.msra.mxu0 0
        %1628 = vmatprep.subr.bf16.mxu0 0
        %1629 = vmatpush1.bf16.msra.mxu0 0
        %1630 = vmatprep.subr.bf16.mxu0 0
        %1631 = vmatpush1.bf16.msra.mxu0 0
        %1632 = vmatprep.subr.bf16.mxu0 0
        %1633 = vmatpush1.bf16.msra.mxu0 0
        %1634 = vmatprep.subr.bf16.mxu0 0
        %1635 = vmatpush1.bf16.msra.mxu0 0
        %1636 = vmatprep.subr.bf16.mxu0 0
        %1637 = vmatpush1.bf16.msra.mxu0 0
        %1638 = vmatprep.subr.bf16.mxu0 0
        %1639 = vmatpush1.bf16.msra.mxu0 0
        %1640 = vmatprep.subr.bf16.mxu0 0
        %1641 = vmatpush1.bf16.msra.mxu0 0
        %1642 = vmatprep.subr.bf16.mxu0 0
        %1643 = vmatpush1.bf16.msra.mxu0 0
        %1644 = vmatprep.mubr.bf16.mxu0 0
        %1645 = vmatmul.mubr.bf16.gmra.mrb[0].mxu0 %v532
        %v1646 = vpop.f32.mrb[0].mxu0
        %v1647 = vadd.f32 %v1598, %v1646
        %v1648 = vpop.f32.mrb[0].mxu0
        %v1649 = vpop.f32.mrb[0].mxu0
        %v1650 = vpop.f32.mrb[0].mxu0
        %1651 = vdwg.mxu0
        %v1652 = vmul.f32 %v1647, 0.25
        %s1653 = scalar_lea.vmem %s6, 48
        %v1654 = vld [vmem:[%s1653] sm:$0xf]
        %v1655 = vld [vmem:[%s1653 + $0x4] sm:$0xf]
        %v1656 = vld [vmem:[%s1653 + $0x8] sm:$0xf]
        %v1657 = vld [vmem:[%s1653 + $0xc] sm:$0xf]
        %s1658 = scalar_lea.vmem %s7, 3
        %v1659 = vld [vmem:[%s1658] sm:$0x1]
        %v1661 = vlaneseq
        %v1662 = vshrl.u32 %v1661, 7
        %v1663 = vsub.s32 0, %v1662
        %v1664 = vrot.slane %v1659, %v1663
        %v1670 = vunpack.c.l.b16 %v1654
        %v1671 = vunpack.c.l.b16 %v1655
        %v1672 = vunpack.c.l.b16 %v1656
        %v1673 = vunpack.c.l.b16 %v1657
        %v1674 = vpack.c.b16 %v1671, %v1670
        %v1675 = vpack.c.b16 %v1673, %v1672
        %1678 = vmatprep.subr.bf16.mxu0 0
        %1679 = vmatpush1.bf16.msra.mxu0 %v1674
        %1680 = vmatprep.subr.bf16.mxu0 0
        %1681 = vmatpush1.bf16.msra.mxu0 %v1675
        %1682 = vmatprep.subr.bf16.mxu0 0
        %1683 = vmatpush1.bf16.msra.mxu0 0
        %1684 = vmatprep.subr.bf16.mxu0 0
        %1685 = vmatpush1.bf16.msra.mxu0 0
        %1686 = vmatprep.subr.bf16.mxu0 0
        %1687 = vmatpush1.bf16.msra.mxu0 0
        %1688 = vmatprep.subr.bf16.mxu0 0
        %1689 = vmatpush1.bf16.msra.mxu0 0
        %1690 = vmatprep.subr.bf16.mxu0 0
        %1691 = vmatpush1.bf16.msra.mxu0 0
        %1692 = vmatprep.subr.bf16.mxu0 0
        %1693 = vmatpush1.bf16.msra.mxu0 0
        %1694 = vmatprep.subr.bf16.mxu0 0
        %1695 = vmatpush1.bf16.msra.mxu0 0
        %1696 = vmatprep.subr.bf16.mxu0 0
        %1697 = vmatpush1.bf16.msra.mxu0 0
        %1698 = vmatprep.subr.bf16.mxu0 0
        %1699 = vmatpush1.bf16.msra.mxu0 0
        %1700 = vmatprep.subr.bf16.mxu0 0
        %1701 = vmatpush1.bf16.msra.mxu0 0
        %1702 = vmatprep.subr.bf16.mxu0 0
        %1703 = vmatpush1.bf16.msra.mxu0 0
        %1704 = vmatprep.subr.bf16.mxu0 0
        %1705 = vmatpush1.bf16.msra.mxu0 0
        %1706 = vmatprep.subr.bf16.mxu0 0
        %1707 = vmatpush1.bf16.msra.mxu0 0
        %1708 = vmatprep.subr.bf16.mxu0 0
        %1709 = vmatpush1.bf16.msra.mxu0 0
        %1710 = vmatprep.mubr.bf16.mxu0 0
        %1711 = vmatmul.mubr.bf16.gmra.mrb[0].mxu0 %v599
        %v1712 = vpop.f32.mrb[0].mxu0
        %v1713 = vadd.f32 %v1664, %v1712
        %v1714 = vpop.f32.mrb[0].mxu0
        %v1715 = vpop.f32.mrb[0].mxu0
        %v1716 = vpop.f32.mrb[0].mxu0
        %1717 = vdwg.mxu0
        %s1718 = scalar_lea.vmem %s8, 48
        %v1719 = vld [vmem:[%s1718] sm:$0xf]
        %v1720 = vld [vmem:[%s1718 + $0x4] sm:$0xf]
        %v1721 = vld [vmem:[%s1718 + $0x8] sm:$0xf]
        %v1722 = vld [vmem:[%s1718 + $0xc] sm:$0xf]
        %s1723 = scalar_lea.vmem %s9, 3
        %v1724 = vld [vmem:[%s1723] sm:$0x1]
        %v1726 = vlaneseq
        %v1727 = vshrl.u32 %v1726, 7
        %v1728 = vsub.s32 0, %v1727
        %v1729 = vrot.slane %v1724, %v1728
        %v1735 = vunpack.c.l.b16 %v1719
        %v1736 = vunpack.c.l.b16 %v1720
        %v1737 = vunpack.c.l.b16 %v1721
        %v1738 = vunpack.c.l.b16 %v1722
        %v1739 = vpack.c.b16 %v1736, %v1735
        %v1740 = vpack.c.b16 %v1738, %v1737
        %1743 = vmatprep.subr.bf16.mxu0 0
        %1744 = vmatpush1.bf16.msra.mxu0 %v1739
        %1745 = vmatprep.subr.bf16.mxu0 0
        %1746 = vmatpush1.bf16.msra.mxu0 %v1740
        %1747 = vmatprep.subr.bf16.mxu0 0
        %1748 = vmatpush1.bf16.msra.mxu0 0
        %1749 = vmatprep.subr.bf16.mxu0 0
        %1750 = vmatpush1.bf16.msra.mxu0 0
        %1751 = vmatprep.subr.bf16.mxu0 0
        %1752 = vmatpush1.bf16.msra.mxu0 0
        %1753 = vmatprep.subr.bf16.mxu0 0
        %1754 = vmatpush1.bf16.msra.mxu0 0
        %1755 = vmatprep.subr.bf16.mxu0 0
        %1756 = vmatpush1.bf16.msra.mxu0 0
        %1757 = vmatprep.subr.bf16.mxu0 0
        %1758 = vmatpush1.bf16.msra.mxu0 0
        %1759 = vmatprep.subr.bf16.mxu0 0
        %1760 = vmatpush1.bf16.msra.mxu0 0
        %1761 = vmatprep.subr.bf16.mxu0 0
        %1762 = vmatpush1.bf16.msra.mxu0 0
        %1763 = vmatprep.subr.bf16.mxu0 0
        %1764 = vmatpush1.bf16.msra.mxu0 0
        %1765 = vmatprep.subr.bf16.mxu0 0
        %1766 = vmatpush1.bf16.msra.mxu0 0
        %1767 = vmatprep.subr.bf16.mxu0 0
        %1768 = vmatpush1.bf16.msra.mxu0 0
        %1769 = vmatprep.subr.bf16.mxu0 0
        %1770 = vmatpush1.bf16.msra.mxu0 0
        %1771 = vmatprep.subr.bf16.mxu0 0
        %1772 = vmatpush1.bf16.msra.mxu0 0
        %1773 = vmatprep.subr.bf16.mxu0 0
        %1774 = vmatpush1.bf16.msra.mxu0 0
        %1775 = vmatprep.mubr.bf16.mxu0 0
        %1776 = vmatmul.mubr.bf16.gmra.mrb[0].mxu0 %v665
        %v1777 = vpop.f32.mrb[0].mxu0
        %v1778 = vadd.f32 %v1729, %v1777
        %v1779 = vpop.f32.mrb[0].mxu0
        %v1780 = vpop.f32.mrb[0].mxu0
        %v1781 = vpop.f32.mrb[0].mxu0
        %1782 = vdwg.mxu0
        %v1783 = vpack.c.bf16 %v1652, %v1652
        %v1784 = vpack.c.bf16 %v1713, %v1713
        %v1785 = vpack.c.bf16 %v1778, %v1778
        %v1787 = vsel %vm710, %v1783, 0
        %v1790 = vsel %vm710, %v1784, 0
        %1792 = vmatprep.subr.bf16.mxu0 0
        %1793 = vmatpush1.bf16.xpose.msra.mxu0 %v1790
        %1794 = vmatprep.subr.bf16.mxu0 0
        %1795 = vmatpush1.bf16.xpose.msra.mxu0 0
        %1796 = vmatprep.subr.bf16.mxu0 0
        %1797 = vmatpush1.bf16.xpose.msra.mxu0 0
        %1798 = vmatprep.subr.bf16.mxu0 0
        %1799 = vmatpush1.bf16.xpose.msra.mxu0 0
        %1800 = vmatprep.subr.bf16.mxu0 0
        %1801 = vmatpush1.bf16.xpose.msra.mxu0 0
        %1802 = vmatprep.subr.bf16.mxu0 0
        %1803 = vmatpush1.bf16.xpose.msra.mxu0 0
        %1804 = vmatprep.subr.bf16.mxu0 0
        %1805 = vmatpush1.bf16.xpose.msra.mxu0 0
        %1806 = vmatprep.subr.bf16.mxu0 0
        %1807 = vmatpush1.bf16.xpose.msra.mxu0 0
        %1808 = vmatprep.subr.bf16.mxu0 0
        %1809 = vmatpush1.bf16.xpose.msra.mxu0 0
        %1810 = vmatprep.subr.bf16.mxu0 0
        %1811 = vmatpush1.bf16.xpose.msra.mxu0 0
        %1812 = vmatprep.subr.bf16.mxu0 0
        %1813 = vmatpush1.bf16.xpose.msra.mxu0 0
        %1814 = vmatprep.subr.bf16.mxu0 0
        %1815 = vmatpush1.bf16.xpose.msra.mxu0 0
        %1816 = vmatprep.subr.bf16.mxu0 0
        %1817 = vmatpush1.bf16.xpose.msra.mxu0 0
        %1818 = vmatprep.subr.bf16.mxu0 0
        %1819 = vmatpush1.bf16.xpose.msra.mxu0 0
        %1820 = vmatprep.subr.bf16.mxu0 0
        %1821 = vmatpush1.bf16.xpose.msra.mxu0 0
        %1822 = vmatprep.subr.bf16.mxu0 0
        %1823 = vmatpush1.bf16.xpose.msra.mxu0 0
        %1824 = vmatprep.mubr.bf16.mxu0 0
        %1825 = vmatmul.mubr.bf16.gmra.mrb[0].mxu0 %v1787
        %v1826 = vpop.f32.mrb[0].mxu0
        %v1827 = vadd.f32 %v506, %v1826
        %v1828 = vpop.f32.mrb[0].mxu0
        %v1829 = vpop.f32.mrb[0].mxu0
        %v1830 = vpop.f32.mrb[0].mxu0
        %1831 = vdwg.mxu0
        %v1832 = vsel %vm757, %v1827, -inf
        %1833 = vmax.xlane.f32.xlu0 %v1832
        %v1834 = vpop.xlane.xlu0 %1833
        %v1835 = vsub.f32 %v1827, %v1834
        %v1836 = vmul.f32 %v1835, 1.442695
        %v1837 = vpow.pop %v1836
        %v1838 = vsel %vm757, %v1837, 0.0
        %1839 = vadd.xlane.f32.xlu0 %v1838
        %v1840 = vpop.xlane.xlu0 %1839
        %v1841 = vrcp.pop %v1840
        %v1842 = vmul.f32 %v1837, %v1841
        %s1843 = scalar_lea.vmem %s481, 24 [#allocation4]
        %1844 = vst.msk [vmem:[%s1843] sm:$0xff] %vm757, %v1842
        %v1845 = vpack.c.bf16 %v1842, %v1842
        %v1847 = vsel %vm757, %v1845, 0
        %v1850 = vsel %vm774, %v1785, 0
        %1852 = vmatprep.subr.bf16.mxu0 0
        %1853 = vmatpush1.bf16.msra.mxu0 %v1850
        %1854 = vmatprep.subr.bf16.mxu0 0
        %1855 = vmatpush1.bf16.msra.mxu0 0
        %1856 = vmatprep.subr.bf16.mxu0 0
        %1857 = vmatpush1.bf16.msra.mxu0 0
        %1858 = vmatprep.subr.bf16.mxu0 0
        %1859 = vmatpush1.bf16.msra.mxu0 0
        %1860 = vmatprep.subr.bf16.mxu0 0
        %1861 = vmatpush1.bf16.msra.mxu0 0
        %1862 = vmatprep.subr.bf16.mxu0 0
        %1863 = vmatpush1.bf16.msra.mxu0 0
        %1864 = vmatprep.subr.bf16.mxu0 0
        %1865 = vmatpush1.bf16.msra.mxu0 0
        %1866 = vmatprep.subr.bf16.mxu0 0
        %1867 = vmatpush1.bf16.msra.mxu0 0
        %1868 = vmatprep.subr.bf16.mxu0 0
        %1869 = vmatpush1.bf16.msra.mxu0 0
        %1870 = vmatprep.subr.bf16.mxu0 0
        %1871 = vmatpush1.bf16.msra.mxu0 0
        %1872 = vmatprep.subr.bf16.mxu0 0
        %1873 = vmatpush1.bf16.msra.mxu0 0
        %1874 = vmatprep.subr.bf16.mxu0 0
        %1875 = vmatpush1.bf16.msra.mxu0 0
        %1876 = vmatprep.subr.bf16.mxu0 0
        %1877 = vmatpush1.bf16.msra.mxu0 0
        %1878 = vmatprep.subr.bf16.mxu0 0
        %1879 = vmatpush1.bf16.msra.mxu0 0
        %1880 = vmatprep.subr.bf16.mxu0 0
        %1881 = vmatpush1.bf16.msra.mxu0 0
        %1882 = vmatprep.subr.bf16.mxu0 0
        %1883 = vmatpush1.bf16.msra.mxu0 0
        %1884 = vmatprep.mubr.bf16.mxu0 0
        %1885 = vmatmul.mubr.bf16.gmra.mrb[0].mxu0 %v1847
        %v1886 = vpop.f32.mrb[0].mxu0
        %v1887 = vadd.f32 0.0, %v1886
        %v1888 = vpop.f32.mrb[0].mxu0
        %v1889 = vpop.f32.mrb[0].mxu0
        %v1890 = vpop.f32.mrb[0].mxu0
        %1891 = vdwg.mxu0
        %v1892 = vpack.c.bf16 %v1887, %v1887
        %s1893 = scalar_lea.vmem %s10, 24
        %v1894 = vld [vmem:[%s1893] sm:$0xf]
        %v1895 = vld [vmem:[%s1893 + $0x4] sm:$0xf]
        %v1898 = vunpack.c.l.b16 %v1894
        %v1899 = vunpack.c.l.b16 %v1895
        %v1900 = vpack.c.b16 %v1899, %v1898
        %v1903 = vsel %vm710, %v1892, 0
        %1905 = vmatprep.subr.bf16.mxu0 0
        %1906 = vmatpush1.bf16.msra.mxu0 %v1900
        %1907 = vmatprep.subr.bf16.mxu0 0
        %1908 = vmatpush1.bf16.msra.mxu0 0
        %1909 = vmatprep.subr.bf16.mxu0 0
        %1910 = vmatpush1.bf16.msra.mxu0 0
        %1911 = vmatprep.subr.bf16.mxu0 0
        %1912 = vmatpush1.bf16.msra.mxu0 0
        %1913 = vmatprep.subr.bf16.mxu0 0
        %1914 = vmatpush1.bf16.msra.mxu0 0
        %1915 = vmatprep.subr.bf16.mxu0 0
        %1916 = vmatpush1.bf16.msra.mxu0 0
        %1917 = vmatprep.subr.bf16.mxu0 0
        %1918 = vmatpush1.bf16.msra.mxu0 0
        %1919 = vmatprep.subr.bf16.mxu0 0
        %1920 = vmatpush1.bf16.msra.mxu0 0
        %1921 = vmatprep.subr.bf16.mxu0 0
        %1922 = vmatpush1.bf16.msra.mxu0 0
        %1923 = vmatprep.subr.bf16.mxu0 0
        %1924 = vmatpush1.bf16.msra.mxu0 0
        %1925 = vmatprep.subr.bf16.mxu0 0
        %1926 = vmatpush1.bf16.msra.mxu0 0
        %1927 = vmatprep.subr.bf16.mxu0 0
        %1928 = vmatpush1.bf16.msra.mxu0 0
        %1929 = vmatprep.subr.bf16.mxu0 0
        %1930 = vmatpush1.bf16.msra.mxu0 0
        %1931 = vmatprep.subr.bf16.mxu0 0
        %1932 = vmatpush1.bf16.msra.mxu0 0
        %1933 = vmatprep.subr.bf16.mxu0 0
        %1934 = vmatpush1.bf16.msra.mxu0 0
        %1935 = vmatprep.subr.bf16.mxu0 0
        %1936 = vmatpush1.bf16.msra.mxu0 0
        %1937 = vmatprep.mubr.bf16.mxu0 0
        %1938 = vmatmul.mubr.bf16.gmra.mrb[0].mxu0 %v1903
        %v1939 = vpop.f32.mrb[0].mxu0
        %v1940 = vadd.f32 0.0, %v1939
        %v1941 = vpop.f32.mrb[0].mxu0
        %v1942 = vpop.f32.mrb[0].mxu0
        %v1943 = vpop.f32.mrb[0].mxu0
        %1944 = vdwg.mxu0
        %v1945 = vadd.f32 %v1586, %v1940
        %v1946 = vld [vmem:[%s11] sm:$0x1]
        %v1948 = vlaneseq
        %v1949 = vshrl.u32 %v1948, 7
        %v1950 = vsub.s32 0, %v1949
        %v1951 = vrot.slane %v1946, %v1950
        %v1953 = vadd.f32 %v1945, %v1951
        %1954 = vst.msk [vmem:[%s474] sm:$0xff] %vm530, %v1953
        %s1955 = sand.u32 %s311, 1
        %s1956 = scalar_lea.sflag [#allocation3], %s1955
        %s1957 = sand.u32 %s311, 1
        %s1958 = smul.addr %s1957, 8
        %s1959 = scalar_lea.vmem [#allocation2], %s1958
        %s1960 = sand.u32 %s337, 1
        %s1961 = scalar_lea.sflag [#allocation5], %s1960
        %s1962 = sand.u32 %s337, 1
        %s1963 = smul.addr %s1962, 32
        %s1964 = scalar_lea.vmem [#allocation4], %s1963
        // Predicated region
        $region69: #{tpu_custom_call.1} parent=67 // pred_check
          %p1965 = pneg %p321
        $region70: #{tpu_custom_call.1} parent=67 // pred_check_branch
          %1967 = sbr.rel (%p1965) target = $region72
        $region71: #{tpu_custom_call.1} parent=67 // pred_region
          %s1969 = ssub.s32 128, 128
          %1970 = vsyncadd %s1956, %s1969
          %s1971 = smul.addr %s31, 128
          %s1972 = scalar_lea.hbm %s12, %s1971
          %s1974 = sshll.u32 %s1959, 4
          %s1975 = int_to_ptr.vmem [resolvable:$true] %s1974
          %1977 = dma.vmem_to_hbm [thread:$0]  %s1975, 128, %s1972, %s1956
        $region72: #{tpu_custom_call.1} parent=67 // pred_fallthru
          _
        // Predicated region
        $region73: #{tpu_custom_call.1} parent=67 // pred_check
          %p1978 = pneg %p347
        $region74: #{tpu_custom_call.1} parent=67 // pred_check_branch
          %1980 = sbr.rel (%p1978) target = $region76
        $region75: #{tpu_custom_call.1} parent=67 // pred_region
          %s1982 = ssub.s32 512, 512
          %1983 = vsyncadd %s1961, %s1982
          %s1984 = smul.addr %s31, 4
          %s1985 = smul.addr %s1984, 128
          %s1986 = scalar_lea.hbm %s13, %s1985
          %s1987 = sshll.u32 %s1964, 4
          %s1988 = int_to_ptr.vmem [resolvable:$true] %s1987
          %1993 = dma.vmem_to_hbm [thread:$0]  %s1988, 512, %s1986, %s1961, 128, 128, 8
        $region76: #{tpu_custom_call.1} parent=67 // pred_fallthru
          _
      $region68: #{tpu_custom_call.1} parent=5 // pred_fallthru
        _
      %p1994 = scmp.le.s32.totalorder 2, %s26
      // Predicated region
      $region77: #{tpu_custom_call.1} parent=5 // pred_check
        %p1995 = pneg %p1994
      $region78: #{tpu_custom_call.1} parent=5 // pred_check_branch
        %1997 = sbr.rel (%p1995) target = $region80
      $region79: #{tpu_custom_call.1} parent=5 // pred_region
        %s1998 = ssub.s32 %s26, 2
        // Predicated region
        $region81: #{tpu_custom_call.1} parent=79 // pred_check
          %p1999 = pneg %p327
        $region82: #{tpu_custom_call.1} parent=79 // pred_check_branch
          %2001 = sbr.rel (%p1999) target = $region84
        $region83: #{tpu_custom_call.1} parent=79 // pred_region
          %s2002 = sand.u32 %s312, 1
          %s2003 = scalar_lea.sflag [#allocation3], %s2002
          %s2004 = sand.u32 %s312, 1
          %s2005 = smul.addr %s2004, 8
          %s2006 = scalar_lea.vmem [#allocation2], %s2005
          %2007 = dma.done %s2003, 128
        $region84: #{tpu_custom_call.1} parent=79 // pred_fallthru
          _
        // Predicated region
        $region85: #{tpu_custom_call.1} parent=79 // pred_check
          %p2008 = pneg %p353
        $region86: #{tpu_custom_call.1} parent=79 // pred_check_branch
          %2010 = sbr.rel (%p2008) target = $region88
        $region87: #{tpu_custom_call.1} parent=79 // pred_region
          %s2011 = sand.u32 %s338, 1
          %s2012 = scalar_lea.sflag [#allocation5], %s2011
          %s2013 = sand.u32 %s338, 1
          %s2014 = smul.addr %s2013, 32
          %s2015 = scalar_lea.vmem [#allocation4], %s2014
          %2016 = dma.done %s2012, 512
        $region88: #{tpu_custom_call.1} parent=79 // pred_fallthru
          _
      $region80: #{tpu_custom_call.1} parent=5 // pred_fallthru
        _
    $region6: #{tpu_custom_call.1} parent=1 // loop_footer
      %s30 = sadd.s32 1, %s26
    $region7: #{tpu_custom_call.1} parent=1 // loop_footer_branch
      %25 = sbr.rel target = $region3
    $region8: #{tpu_custom_call.1} parent=1 // loop_exit
      _
    %2017 = vsyncpa [#allocation3], 1
    %s2018 = scalar_lea.sflag [#allocation3], 1
    %2019 = vsyncpa %s2018, 1
    %2020 = vsyncpa [#allocation5], 1
    %s2021 = scalar_lea.sflag [#allocation5], 1
    %2022 = vsyncpa %s2021, 1

</llo_original>
